<compile_context>
chip_gen: v7x
topology: tpu7x:2x2x1
jax: 0.10.0
libtpu: 0.0.40
codegen_flags: <defaults>
</compile_context>

<pallas_src>
import math

import jax
import jax.numpy as jnp
from jax import lax
from jax.experimental import pallas as pl
from jax.experimental.pallas import tpu as pltpu


def _round_up(x, m):
    return ((x + m - 1) // m) * m


# ------------------------------ Pallas kernel ------------------------------

def _make_fusion_kernel(n_comp):
    """y^T block = sum_i W_i @ x_i^T + b (fore rows of W_i carry the ReLU mask)."""
    dn = (((1,), (1,)), ((), ()))  # contract the feature dim of both operands

    def kernel(*refs):
        x_refs = refs[:n_comp]                 # (TB, d_i) each
        w_refs = refs[n_comp:2 * n_comp]       # (N_sub, d_i) each, grid-invariant
        b_ref = refs[2 * n_comp]               # (N_sub, 1),   grid-invariant
        y_ref = refs[2 * n_comp + 1]           # (N_sub, TB)

        acc = lax.dot_general(w_refs[0][...], x_refs[0][...], dn,
                              precision=lax.Precision.HIGHEST,
                              preferred_element_type=jnp.float32)
        for i in range(1, n_comp):
            acc = acc + lax.dot_general(w_refs[i][...], x_refs[i][...], dn,
                                        precision=lax.Precision.HIGHEST,
                                        preferred_element_type=jnp.float32)
        y_ref[...] = acc + b_ref[...]          # bias broadcasts over lanes (batch)

    return kernel


# ------------------------------ wrapper ------------------------------

def fusion_switch_forward(outs, params):
    """Pallas implementation of TrainableFusionSwitch.forward (useExtralin=False).

    outs:   list of (B, 2*input_size_all[i]) float32 arrays.
    params: 'switchweights' (n_comp,), 'fore_w' (out_size, D_total),
            'fore_b' (out_size,), 'comp_ws' list of (2*d_i,), 'comp_bs' list of ().
    Returns (op, Outs) matching the PyTorch module.
    """
    n_comp = len(outs)
    dims = [int(o.shape[-1]) for o in outs]            # static python ints
    D_total = int(sum(dims))
    B = int(outs[0].shape[0])
    out_size = int(params["fore_w"].shape[0])

    N_out = out_size + n_comp
    N_sub = _round_up(N_out, 8)                        # sublane pad only (not 128 lanes)

    # ---- per-component fused weights (tiny, built once in plain JAX) ----
    mask = jax.nn.relu(params["switchweights"].astype(jnp.float32))   # (n_comp,)
    fore_w = params["fore_w"].astype(jnp.float32)                     # (out_size, D_total)
    fore_b = params["fore_b"].astype(jnp.float32)                     # (out_size,)

    offs = [0]
    for d in dims:
        offs.append(offs[-1] + d)

    w_blocks = []
    for i, d in enumerate(dims):
        wf_i = mask[i] * fore_w[:, offs[i]:offs[i] + d]               # mask folded into fore rows
        comp_rows = jnp.zeros((n_comp, d), jnp.float32).at[i].set(
            params["comp_ws"][i].astype(jnp.float32))                 # comp rows see UNmasked x
        w_i = jnp.concatenate([wf_i, comp_rows], axis=0)              # (N_out, d_i)
        w_blocks.append(jnp.pad(w_i, ((0, N_sub - N_out), (0, 0))))   # (N_sub, d_i)

    b_fused = jnp.concatenate(
        [fore_b,
         jnp.stack([params["comp_bs"][i].astype(jnp.float32) for i in range(n_comp)])])
    b_fused = jnp.pad(b_fused, (0, N_sub - N_out)).reshape(N_sub, 1)  # (N_sub, 1)

    xs = [o.astype(jnp.float32) for o in outs]

    # ---- batch tiling (batch is the LANE dim of the transposed output) ----
    if B <= 256:
        TB = B                      # one block; every block dim equals the array dim
    else:
        # >=4 grid steps so v7x's two TensorCores both get work; lane-dense
        # 128-multiples; keep x double-buffers well under v5e's 16 MiB scoped VMEM.
        vmem_cap = max(128, (((4 * 1024 * 1024) // (8 * D_total)) // 128) * 128)
        TB = max(128, min(1024, vmem_cap, _round_up(pl.cdiv(B, 4), 128)))
    grid_b = pl.cdiv(B, TB)
    B_out = grid_b * TB             # pad only the output ALLOCATION (no jnp.pad of inputs)

    in_specs = ([pl.BlockSpec((TB, d), lambda i: (i, 0)) for d in dims] +      # x_i streamed
                [pl.BlockSpec((N_sub, d), lambda i: (0, 0)) for d in dims] +   # W_i resident
                [pl.BlockSpec((N_sub, 1), lambda i: (0, 0))])                  # bias resident

    yT = pl.pallas_call(
        _make_fusion_kernel(n_comp),
        out_shape=jax.ShapeDtypeStruct((N_sub, B_out), jnp.float32),
        grid=(grid_b,),
        in_specs=in_specs,
        out_specs=pl.BlockSpec((N_sub, TB), lambda i: (0, i)),
        compiler_params=pltpu.CompilerParams(
            dimension_semantics=("parallel",)),        # megacore sharding on v7x
    )(*xs, *w_blocks, b_fused)

    # ---- single contiguous slice; rows of the tiny (N_out, B) result are free ----
    y_valid = yT[:N_out, :B]
    op = y_valid[0] if out_size == 1 else y_valid[:out_size].T   # torch .squeeze(-1)
    Outs = [y_valid[out_size + i] for i in range(n_comp)]        # each (B,)
    return op, Outs


# ------------------------------ reference (pure JAX) ------------------------------

def fusion_switch_reference(outs, params):
    m = jax.nn.relu(params["switchweights"].astype(jnp.float32))
    cont = jnp.concatenate([m[i] * outs[i] for i in range(len(outs))], axis=-1)
    op = jnp.dot(cont, params["fore_w"].T,
                 precision=lax.Precision.HIGHEST) + params["fore_b"]
    if params["fore_w"].shape[0] == 1:
        op = op[:, 0]
    Outs = [jnp.dot(outs[i], params["comp_ws"][i],
                    precision=lax.Precision.HIGHEST) + params["comp_bs"][i]
            for i in range(len(outs))]
    return op, Outs


# ------------------------------ main ------------------------------

if __name__ == "__main__":
    # Module configuration (small, consistent with __init__)
    input_size_all = [4, 6, 8]
    hidden_size = 16          # unused since useExtralin=False (module default)
    out_size = 1
    bidirectional = True
    multiplier = 2 if bidirectional else 1
    B = 2

    key = jax.random.PRNGKey(0)
    keys = jax.random.split(key, 16)

    # Inputs: one tensor per component, (B, multiplier * input_size_all[i])
    outs = []
    for i, d in enumerate(input_size_all):
        outs.append(jax.random.normal(keys[i], (B, multiplier * d), jnp.float32))

    # Deterministic parameter init (PyTorch Linear-style uniform bounds)
    D_total = multiplier * sum(input_size_all)
    bound_f = 1.0 / math.sqrt(D_total)
    fore_w = jax.random.uniform(keys[4], (out_size, D_total), jnp.float32,
                                -bound_f, bound_f)
    fore_b = jax.random.uniform(keys[5], (out_size,), jnp.float32,
                                -bound_f, bound_f)
    comp_ws, comp_bs = [], []
    for i, d in enumerate(input_size_all):
        fan_in = multiplier * d
        bnd = 1.0 / math.sqrt(fan_in)
        comp_ws.append(jax.random.uniform(keys[6 + 2 * i], (fan_in,), jnp.float32,
                                          -bnd, bnd))
        comp_bs.append(jax.random.uniform(keys[7 + 2 * i], (), jnp.float32,
                                          -bnd, bnd))
    params = {
        "switchweights": jnp.full((len(input_size_all),), 0.1, jnp.float32),
        "fore_w": fore_w,
        "fore_b": fore_b,
        "comp_ws": comp_ws,
        "comp_bs": comp_bs,
    }

    # TODO(synk): useExtralin=True branch (extra Linear + ReLU) not exercised;
    # the default module config uses the single foreLinear path implemented here.

    op, Outs = fusion_switch_forward(outs, params)
    op = jax.block_until_ready(op)
    Outs = [jax.block_until_ready(o) for o in Outs]

    op_ref, Outs_ref = fusion_switch_reference(outs, params)
    assert op.shape == op_ref.shape
    assert jnp.allclose(op, op_ref, atol=1e-5, rtol=1e-5)
    for o, o_ref in zip(Outs, Outs_ref):
        assert o.shape == o_ref.shape
        assert jnp.allclose(o, o_ref, atol=1e-5, rtol=1e-5)

    print("KERNEL_OK")
</pallas_src>

<mosaic_0001>
module attributes {stable_mosaic.version = 11 : i64} {
  func.func @kernel(%arg0: i32, %arg1: memref<2x8xf32, #tpu.memory_space<vmem>>, %arg2: memref<2x12xf32, #tpu.memory_space<vmem>>, %arg3: memref<2x16xf32, #tpu.memory_space<vmem>>, %arg4: memref<8x8xf32, #tpu.memory_space<vmem>>, %arg5: memref<8x12xf32, #tpu.memory_space<vmem>>, %arg6: memref<8x16xf32, #tpu.memory_space<vmem>>, %arg7: memref<8x1xf32, #tpu.memory_space<vmem>>, %arg8: memref<8x2xf32, #tpu.memory_space<vmem>>) attributes {dimension_semantics = [#tpu.dimension_semantics<parallel>], iteration_bounds = array<i64: 1>, scalar_prefetch = 0 : i64, scratch_operands = 0 : i64, tpu.core_type = #tpu.core_type<tc>, window_params = [{transform_indices = @transform_0, window_bounds = array<i64: 2, 8>}, {transform_indices = @transform_1, window_bounds = array<i64: 2, 12>}, {transform_indices = @transform_2, window_bounds = array<i64: 2, 16>}, {pipeline_mode = #tpu.pipeline_mode<synchronous>, transform_indices = @transform_3, window_bounds = array<i64: 8, 8>}, {pipeline_mode = #tpu.pipeline_mode<synchronous>, transform_indices = @transform_4, window_bounds = array<i64: 8, 12>}, {pipeline_mode = #tpu.pipeline_mode<synchronous>, transform_indices = @transform_5, window_bounds = array<i64: 8, 16>}, {pipeline_mode = #tpu.pipeline_mode<synchronous>, transform_indices = @transform_6, window_bounds = array<i64: 8, 1>}, {transform_indices = @transform_7, window_bounds = array<i64: 8, 2>}]} {
    %c0 = arith.constant 0 : index
    %c0_0 = arith.constant 0 : index
    %0 = vector.load %arg4[%c0, %c0_0] : memref<8x8xf32, #tpu.memory_space<vmem>>, vector<8x8xf32>
    %c0_1 = arith.constant 0 : index
    %c0_2 = arith.constant 0 : index
    %1 = vector.load %arg1[%c0_1, %c0_2] : memref<2x8xf32, #tpu.memory_space<vmem>>, vector<2x8xf32>
    %cst = arith.constant dense<0.000000e+00> : vector<8x2xf32>
    %2 = tpu.matmul %0, %1, %cst {dimension_numbers = #tpu.dot_dimension_numbers<[1], [1], [0], [0], [0, 0, 1, 0], [], []>, precision = #tpu.contract_precision<fp32>} : vector<8x8xf32>, vector<2x8xf32>, vector<8x2xf32> -> vector<8x2xf32>
    %c0_3 = arith.constant 0 : index
    %c0_4 = arith.constant 0 : index
    %3 = vector.load %arg5[%c0_3, %c0_4] : memref<8x12xf32, #tpu.memory_space<vmem>>, vector<8x12xf32>
    %c0_5 = arith.constant 0 : index
    %c0_6 = arith.constant 0 : index
    %4 = vector.load %arg2[%c0_5, %c0_6] : memref<2x12xf32, #tpu.memory_space<vmem>>, vector<2x12xf32>
    %cst_7 = arith.constant dense<0.000000e+00> : vector<8x2xf32>
    %5 = tpu.matmul %3, %4, %cst_7 {dimension_numbers = #tpu.dot_dimension_numbers<[1], [1], [0], [0], [0, 0, 1, 0], [], []>, precision = #tpu.contract_precision<fp32>} : vector<8x12xf32>, vector<2x12xf32>, vector<8x2xf32> -> vector<8x2xf32>
    %6 = arith.addf %2, %5 : vector<8x2xf32>
    %c0_8 = arith.constant 0 : index
    %c0_9 = arith.constant 0 : index
    %7 = vector.load %arg6[%c0_8, %c0_9] : memref<8x16xf32, #tpu.memory_space<vmem>>, vector<8x16xf32>
    %c0_10 = arith.constant 0 : index
    %c0_11 = arith.constant 0 : index
    %8 = vector.load %arg3[%c0_10, %c0_11] : memref<2x16xf32, #tpu.memory_space<vmem>>, vector<2x16xf32>
    %cst_12 = arith.constant dense<0.000000e+00> : vector<8x2xf32>
    %9 = tpu.matmul %7, %8, %cst_12 {dimension_numbers = #tpu.dot_dimension_numbers<[1], [1], [0], [0], [0, 0, 1, 0], [], []>, precision = #tpu.contract_precision<fp32>} : vector<8x16xf32>, vector<2x16xf32>, vector<8x2xf32> -> vector<8x2xf32>
    %10 = arith.addf %6, %9 : vector<8x2xf32>
    %c0_13 = arith.constant 0 : index
    %c0_14 = arith.constant 0 : index
    %11 = vector.load %arg7[%c0_13, %c0_14] : memref<8x1xf32, #tpu.memory_space<vmem>>, vector<8x1xf32>
    %12 = vector.broadcast %11 : vector<8x1xf32> to vector<8x2xf32>
    %13 = arith.addf %10, %12 : vector<8x2xf32>
    %c0_15 = arith.constant 0 : index
    %c0_16 = arith.constant 0 : index
    %14 = vector.load %arg8[%c0_15, %c0_16] : memref<8x2xf32, #tpu.memory_space<vmem>>, vector<8x2xf32>
    tpu.vector_store %arg8[%c0_15, %c0_16], %13 {strides = array<i32>} : memref<8x2xf32, #tpu.memory_space<vmem>>, vector<8x2xf32>,
    return
  }
  func.func @transform_0(%arg0: i32) -> (i32, i32) {
    %c0_i32 = arith.constant 0 : i32
    %c0_i32_0 = arith.constant 0 : i32
    return %arg0, %c0_i32 : i32, i32
  }
  func.func @transform_1(%arg0: i32) -> (i32, i32) {
    %c0_i32 = arith.constant 0 : i32
    %c0_i32_0 = arith.constant 0 : i32
    return %arg0, %c0_i32 : i32, i32
  }
  func.func @transform_2(%arg0: i32) -> (i32, i32) {
    %c0_i32 = arith.constant 0 : i32
    %c0_i32_0 = arith.constant 0 : i32
    return %arg0, %c0_i32 : i32, i32
  }
  func.func @transform_3(%arg0: i32) -> (i32, i32) {
    %c0_i32 = arith.constant 0 : i32
    %c0_i32_0 = arith.constant 0 : i32
    %c0_i32_1 = arith.constant 0 : i32
    return %c0_i32, %c0_i32_0 : i32, i32
  }
  func.func @transform_4(%arg0: i32) -> (i32, i32) {
    %c0_i32 = arith.constant 0 : i32
    %c0_i32_0 = arith.constant 0 : i32
    %c0_i32_1 = arith.constant 0 : i32
    return %c0_i32, %c0_i32_0 : i32, i32
  }
  func.func @transform_5(%arg0: i32) -> (i32, i32) {
    %c0_i32 = arith.constant 0 : i32
    %c0_i32_0 = arith.constant 0 : i32
    %c0_i32_1 = arith.constant 0 : i32
    return %c0_i32, %c0_i32_0 : i32, i32
  }
  func.func @transform_6(%arg0: i32) -> (i32, i32) {
    %c0_i32 = arith.constant 0 : i32
    %c0_i32_0 = arith.constant 0 : i32
    %c0_i32_1 = arith.constant 0 : i32
    return %c0_i32, %c0_i32_0 : i32, i32
  }
  func.func @transform_7(%arg0: i32) -> (i32, i32) {
    %c0_i32 = arith.constant 0 : i32
    %c0_i32_0 = arith.constant 0 : i32
    return %c0_i32, %arg0 : i32, i32
  }
}

</mosaic_0001>

<llo_original>
// kernel: tpu_custom_call.1
$region0: #{tpu_custom_call.1}
  #allocation0 [shape = 'u32[]', space=smem, size = 0x4, offset = 0x4, fixed_abs, tag = 'smem constant byte address 0x4 - core index']
  #allocation1 [shape = 'u32[144,128]{1,0:T(1,128)}', space=vmem, size = 0x12000, scoped, tag = 'internal scratch']
  %s0 = inlined_call_operand.hbm [shape: f32[2,8], index: 0, kind: input, shape index: {}]
  %s1 = inlined_call_operand.hbm [shape: f32[2,12], index: 1, kind: input, shape index: {}]
  %s2 = inlined_call_operand.hbm [shape: f32[2,16], index: 2, kind: input, shape index: {}]
  %s3 = inlined_call_operand.vmem [shape: f32[8,8], index: 3, kind: input, shape index: {}]
  %s4 = inlined_call_operand.vmem [shape: f32[8,12], index: 4, kind: input, shape index: {}]
  %s5 = inlined_call_operand.vmem [shape: f32[8,16], index: 5, kind: input, shape index: {}]
  %s6 = inlined_call_operand.vmem [shape: f32[8,1], index: 6, kind: input, shape index: {}]
  %s7 = inlined_call_operand.vmem [shape: f32[8,2], index: 7, kind: output, shape index: {}]
  %s8 = sld [smem:[#allocation0]]
  $region50: #{tpu_custom_call.1} parent=0
    _
  %s10 = ssub.s32 1, %s8
  %s11 = scalar_select 0, %s10, %s8
  $region1: #{tpu_custom_call.1} parent=0
    #allocation2 [shape = 'u8[1024]{0}', space=vmem, size = 0x400, scoped, tag = 'input window, operand 0, single buffered']
    #allocation3 [shape = 's32[1]{0}', space=sflag, size = 0x4, scoped, tag = 'scoped memory for tpu_custom_call.1']
    #allocation4 [shape = 'u8[1024]{0}', space=vmem, size = 0x400, scoped, tag = 'input window, operand 1, single buffered']
    #allocation5 [shape = 's32[1]{0}', space=sflag, size = 0x4, scoped, tag = 'scoped memory for tpu_custom_call.1']
    #allocation6 [shape = 'u8[1024]{0}', space=vmem, size = 0x400, scoped, tag = 'input window, operand 2, single buffered']
    %12 = vsyncpa [#allocation3], 0
    %13 = vsyncpa [#allocation5], 0
    // Predicated region
    $region2: #{tpu_custom_call.1} parent=1 // pred_check
      _
    $region3: #{tpu_custom_call.1} parent=1 // pred_check_branch
      %15 = sbr.rel (0) target = $region5
    $region4: #{tpu_custom_call.1} parent=1 // pred_region
      %s17 = ssub.s32 32, 32
      %18 = vsyncadd [#allocation3], %s17
      %s20 = sshll.u32 [#allocation2], 4
      %s21 = int_to_ptr.vmem [resolvable:$true] %s20
      %23 = dma.hbm_to_vmem [thread:$0]  %s0, 32, %s21, [#allocation3]
    $region5: #{tpu_custom_call.1} parent=1 // pred_fallthru
      _
    // Predicated region
    $region6: #{tpu_custom_call.1} parent=1 // pred_check
      _
    $region7: #{tpu_custom_call.1} parent=1 // pred_check_branch
      %25 = sbr.rel (0) target = $region9
    $region8: #{tpu_custom_call.1} parent=1 // pred_region
      %s27 = ssub.s32 32, 32
      %28 = vsyncadd [#allocation5], %s27
      %s30 = sshll.u32 [#allocation4], 4
      %s31 = int_to_ptr.vmem [resolvable:$true] %s30
      %33 = dma.hbm_to_vmem [thread:$0]  %s1, 32, %s31, [#allocation5]
    $region9: #{tpu_custom_call.1} parent=1 // pred_fallthru
      _
    // Predicated region
    $region10: #{tpu_custom_call.1} parent=1 // pred_check
      _
    $region11: #{tpu_custom_call.1} parent=1 // pred_check_branch
      %35 = sbr.rel (0) target = $region13
    $region12: #{tpu_custom_call.1} parent=1 // pred_region
      %s37 = ssub.s32 32, 32
      %38 = vsyncadd [#allocation5], %s37
      %s40 = sshll.u32 [#allocation6], 4
      %s41 = int_to_ptr.vmem [resolvable:$true] %s40
      %43 = dma.hbm_to_vmem [thread:$0]  %s2, 32, %s41, [#allocation5]
    $region13: #{tpu_custom_call.1} parent=1 // pred_fallthru
      _
    // Predicated region
    $region14: #{tpu_custom_call.1} parent=1 // pred_check
      _
    $region15: #{tpu_custom_call.1} parent=1 // pred_check_branch
      %45 = sbr.rel (0) target = $region17
    $region16: #{tpu_custom_call.1} parent=1 // pred_region
      _
    $region17: #{tpu_custom_call.1} parent=1 // pred_fallthru
      _
    // Predicated region
    $region18: #{tpu_custom_call.1} parent=1 // pred_check
      _
    $region19: #{tpu_custom_call.1} parent=1 // pred_check_branch
      %47 = sbr.rel (0) target = $region21
    $region20: #{tpu_custom_call.1} parent=1 // pred_region
      _
    $region21: #{tpu_custom_call.1} parent=1 // pred_fallthru
      _
    // Predicated region
    $region22: #{tpu_custom_call.1} parent=1 // pred_check
      _
    $region23: #{tpu_custom_call.1} parent=1 // pred_check_branch
      %49 = sbr.rel (0) target = $region25
    $region24: #{tpu_custom_call.1} parent=1 // pred_region
      _
    $region25: #{tpu_custom_call.1} parent=1 // pred_fallthru
      _
    // Predicated region
    $region26: #{tpu_custom_call.1} parent=1 // pred_check
      _
    $region27: #{tpu_custom_call.1} parent=1 // pred_check_branch
      %51 = sbr.rel (0) target = $region29
    $region28: #{tpu_custom_call.1} parent=1 // pred_region
      _
    $region29: #{tpu_custom_call.1} parent=1 // pred_fallthru
      _
    // Predicated region
    $region30: #{tpu_custom_call.1} parent=1 // pred_check
      _
    $region31: #{tpu_custom_call.1} parent=1 // pred_check_branch
      %53 = sbr.rel (0) target = $region33
    $region32: #{tpu_custom_call.1} parent=1 // pred_region
      %54 = dma.done [#allocation3], 32
    $region33: #{tpu_custom_call.1} parent=1 // pred_fallthru
      _
    // Predicated region
    $region34: #{tpu_custom_call.1} parent=1 // pred_check
      _
    $region35: #{tpu_custom_call.1} parent=1 // pred_check_branch
      %56 = sbr.rel (0) target = $region37
    $region36: #{tpu_custom_call.1} parent=1 // pred_region
      %57 = dma.done [#allocation5], 32
    $region37: #{tpu_custom_call.1} parent=1 // pred_fallthru
      _
    // Predicated region
    $region38: #{tpu_custom_call.1} parent=1 // pred_check
      _
    $region39: #{tpu_custom_call.1} parent=1 // pred_check_branch
      %59 = sbr.rel (0) target = $region41
    $region40: #{tpu_custom_call.1} parent=1 // pred_region
      %60 = dma.done [#allocation5], 32
    $region41: #{tpu_custom_call.1} parent=1 // pred_fallthru
      _
    %v61 = vld [vmem:[%s3] sm:$0xff]
    %v62 = vld [vmem:[#allocation2] sm:$0x3]
    %v63 = vld [vmem:[%s4] sm:$0xff]
    %v64 = vld [vmem:[#allocation4] sm:$0x3]
    %vm65 = vcmask 97280
    %v67 = vsel %vm65, %v63, 0
    %v70 = vsel %vm65, %v64, 0
    %72 = vmatprep.subr.mxu0 0.0
    %v73 = vand.u32 %v70, 4294901760
    %74 = vmatpush1.xpose.msra.mxu0 %v73
    %75 = vmatprep.subr.mxu0 0.0
    %76 = vmatpush1.xpose.msra.mxu0 0.0
    %77 = vmatprep.subr.mxu0 0.0
    %78 = vmatpush1.xpose.msra.mxu0 0.0
    %79 = vmatprep.subr.mxu0 0.0
    %80 = vmatpush1.xpose.msra.mxu0 0.0
    %81 = vmatprep.subr.mxu0 0.0
    %82 = vmatpush1.xpose.msra.mxu0 0.0
    %83 = vmatprep.subr.mxu0 0.0
    %84 = vmatpush1.xpose.msra.mxu0 0.0
    %85 = vmatprep.subr.mxu0 0.0
    %86 = vmatpush1.xpose.msra.mxu0 0.0
    %87 = vmatprep.subr.mxu0 0.0
    %88 = vmatpush1.xpose.msra.mxu0 0.0
    %89 = vmatprep.subr.mxu0 0.0
    %90 = vmatpush1.xpose.msra.mxu0 0.0
    %91 = vmatprep.subr.mxu0 0.0
    %92 = vmatpush1.xpose.msra.mxu0 0.0
    %93 = vmatprep.subr.mxu0 0.0
    %94 = vmatpush1.xpose.msra.mxu0 0.0
    %95 = vmatprep.subr.mxu0 0.0
    %96 = vmatpush1.xpose.msra.mxu0 0.0
    %97 = vmatprep.subr.mxu0 0.0
    %98 = vmatpush1.xpose.msra.mxu0 0.0
    %99 = vmatprep.subr.mxu0 0.0
    %100 = vmatpush1.xpose.msra.mxu0 0.0
    %101 = vmatprep.subr.mxu0 0.0
    %102 = vmatpush1.xpose.msra.mxu0 0.0
    %103 = vmatprep.subr.mxu0 0.0
    %104 = vmatpush1.xpose.msra.mxu0 0.0
    %105 = vmatprep.subr.mxu0 0.0
    %106 = vmatpush1.xpose.msra.mxu0 0.0
    %107 = vmatprep.subr.mxu0 0.0
    %108 = vmatpush1.xpose.msra.mxu0 0.0
    %109 = vmatprep.subr.mxu0 0.0
    %110 = vmatpush1.xpose.msra.mxu0 0.0
    %111 = vmatprep.subr.mxu0 0.0
    %112 = vmatpush1.xpose.msra.mxu0 0.0
    %113 = vmatprep.subr.mxu0 0.0
    %114 = vmatpush1.xpose.msra.mxu0 0.0
    %115 = vmatprep.subr.mxu0 0.0
    %116 = vmatpush1.xpose.msra.mxu0 0.0
    %117 = vmatprep.subr.mxu0 0.0
    %118 = vmatpush1.xpose.msra.mxu0 0.0
    %119 = vmatprep.subr.mxu0 0.0
    %120 = vmatpush1.xpose.msra.mxu0 0.0
    %121 = vmatprep.subr.mxu0 0.0
    %122 = vmatpush1.xpose.msra.mxu0 0.0
    %123 = vmatprep.subr.mxu0 0.0
    %124 = vmatpush1.xpose.msra.mxu0 0.0
    %125 = vmatprep.subr.mxu0 0.0
    %126 = vmatpush1.xpose.msra.mxu0 0.0
    %127 = vmatprep.subr.mxu0 0.0
    %128 = vmatpush1.xpose.msra.mxu0 0.0
    %129 = vmatprep.subr.mxu0 0.0
    %130 = vmatpush1.xpose.msra.mxu0 0.0
    %131 = vmatprep.subr.mxu0 0.0
    %132 = vmatpush1.xpose.msra.mxu0 0.0
    %133 = vmatprep.subr.mxu0 0.0
    %134 = vmatpush1.xpose.msra.mxu0 0.0
    %135 = vmatprep.subr.mxu0 0.0
    %136 = vmatpush1.xpose.msra.mxu0 0.0
    %137 = vmatprep.mubr.f32.mxu0 0.0
    %v138 = vand.u32 %v67, 4294901760
    %v139 = vsub.f32 %v67, %v138
    %v140 = vand.u32 %v139, 4294901760
    %v141 = vsub.f32 %v139, %v140
    %v142 = vand.u32 %v141, 4294901760
    %143 = vmatmul.mubr.f32.gmra.mrb[0].mxu0 %v142
    %v144 = vpop.f32.mrb[0].mxu0
    %v145 = vadd.f32 0.0, %v144
    %v146 = vpop.f32.mrb[0].mxu0
    %147 = vdwg.mxu0
    %148 = vmatprep.subr.mxu0 0.0
    %v149 = vand.u32 %v70, 4294901760
    %v150 = vsub.f32 %v70, %v149
    %v151 = vand.u32 %v150, 4294901760
    %v152 = vsub.f32 %v150, %v151
    %v153 = vand.u32 %v152, 4294901760
    %154 = vmatpush1.xpose.msra.mxu0 %v153
    %155 = vmatprep.subr.mxu0 0.0
    %156 = vmatpush1.xpose.msra.mxu0 0.0
    %157 = vmatprep.subr.mxu0 0.0
    %158 = vmatpush1.xpose.msra.mxu0 0.0
    %159 = vmatprep.subr.mxu0 0.0
    %160 = vmatpush1.xpose.msra.mxu0 0.0
    %161 = vmatprep.subr.mxu0 0.0
    %162 = vmatpush1.xpose.msra.mxu0 0.0
    %163 = vmatprep.subr.mxu0 0.0
    %164 = vmatpush1.xpose.msra.mxu0 0.0
    %165 = vmatprep.subr.mxu0 0.0
    %166 = vmatpush1.xpose.msra.mxu0 0.0
    %167 = vmatprep.subr.mxu0 0.0
    %168 = vmatpush1.xpose.msra.mxu0 0.0
    %169 = vmatprep.subr.mxu0 0.0
    %170 = vmatpush1.xpose.msra.mxu0 0.0
    %171 = vmatprep.subr.mxu0 0.0
    %172 = vmatpush1.xpose.msra.mxu0 0.0
    %173 = vmatprep.subr.mxu0 0.0
    %174 = vmatpush1.xpose.msra.mxu0 0.0
    %175 = vmatprep.subr.mxu0 0.0
    %176 = vmatpush1.xpose.msra.mxu0 0.0
    %177 = vmatprep.subr.mxu0 0.0
    %178 = vmatpush1.xpose.msra.mxu0 0.0
    %179 = vmatprep.subr.mxu0 0.0
    %180 = vmatpush1.xpose.msra.mxu0 0.0
    %181 = vmatprep.subr.mxu0 0.0
    %182 = vmatpush1.xpose.msra.mxu0 0.0
    %183 = vmatprep.subr.mxu0 0.0
    %184 = vmatpush1.xpose.msra.mxu0 0.0
    %185 = vmatprep.subr.mxu0 0.0
    %186 = vmatpush1.xpose.msra.mxu0 0.0
    %187 = vmatprep.subr.mxu0 0.0
    %188 = vmatpush1.xpose.msra.mxu0 0.0
    %189 = vmatprep.subr.mxu0 0.0
    %190 = vmatpush1.xpose.msra.mxu0 0.0
    %191 = vmatprep.subr.mxu0 0.0
    %192 = vmatpush1.xpose.msra.mxu0 0.0
    %193 = vmatprep.subr.mxu0 0.0
    %194 = vmatpush1.xpose.msra.mxu0 0.0
    %195 = vmatprep.subr.mxu0 0.0
    %196 = vmatpush1.xpose.msra.mxu0 0.0
    %197 = vmatprep.subr.mxu0 0.0
    %198 = vmatpush1.xpose.msra.mxu0 0.0
    %199 = vmatprep.subr.mxu0 0.0
    %200 = vmatpush1.xpose.msra.mxu0 0.0
    %201 = vmatprep.subr.mxu0 0.0
    %202 = vmatpush1.xpose.msra.mxu0 0.0
    %203 = vmatprep.subr.mxu0 0.0
    %204 = vmatpush1.xpose.msra.mxu0 0.0
    %205 = vmatprep.subr.mxu0 0.0
    %206 = vmatpush1.xpose.msra.mxu0 0.0
    %207 = vmatprep.subr.mxu0 0.0
    %208 = vmatpush1.xpose.msra.mxu0 0.0
    %209 = vmatprep.subr.mxu0 0.0
    %210 = vmatpush1.xpose.msra.mxu0 0.0
    %211 = vmatprep.subr.mxu0 0.0
    %212 = vmatpush1.xpose.msra.mxu0 0.0
    %213 = vmatprep.subr.mxu0 0.0
    %214 = vmatpush1.xpose.msra.mxu0 0.0
    %215 = vmatprep.subr.mxu0 0.0
    %216 = vmatpush1.xpose.msra.mxu0 0.0
    %217 = vmatprep.mubr.f32.mxu0 0.0
    %v218 = vand.u32 %v67, 4294901760
    %219 = vmatmul.mubr.f32.gmra.mrb[0].mxu0 %v218
    %v220 = vpop.f32.mrb[0].mxu0
    %v221 = vadd.f32 %v145, %v220
    %v222 = vpop.f32.mrb[0].mxu0
    %223 = vdwg.mxu0
    %224 = vmatprep.subr.mxu0 0.0
    %v225 = vand.u32 %v70, 4294901760
    %v226 = vsub.f32 %v70, %v225
    %227 = vmatpush1.xpose.msra.mxu0 %v226
    %228 = vmatprep.subr.mxu0 0.0
    %229 = vmatpush1.xpose.msra.mxu0 0.0
    %230 = vmatprep.subr.mxu0 0.0
    %231 = vmatpush1.xpose.msra.mxu0 0.0
    %232 = vmatprep.subr.mxu0 0.0
    %233 = vmatpush1.xpose.msra.mxu0 0.0
    %234 = vmatprep.subr.mxu0 0.0
    %235 = vmatpush1.xpose.msra.mxu0 0.0
    %236 = vmatprep.subr.mxu0 0.0
    %237 = vmatpush1.xpose.msra.mxu0 0.0
    %238 = vmatprep.subr.mxu0 0.0
    %239 = vmatpush1.xpose.msra.mxu0 0.0
    %240 = vmatprep.subr.mxu0 0.0
    %241 = vmatpush1.xpose.msra.mxu0 0.0
    %242 = vmatprep.subr.mxu0 0.0
    %243 = vmatpush1.xpose.msra.mxu0 0.0
    %244 = vmatprep.subr.mxu0 0.0
    %245 = vmatpush1.xpose.msra.mxu0 0.0
    %246 = vmatprep.subr.mxu0 0.0
    %247 = vmatpush1.xpose.msra.mxu0 0.0
    %248 = vmatprep.subr.mxu0 0.0
    %249 = vmatpush1.xpose.msra.mxu0 0.0
    %250 = vmatprep.subr.mxu0 0.0
    %251 = vmatpush1.xpose.msra.mxu0 0.0
    %252 = vmatprep.subr.mxu0 0.0
    %253 = vmatpush1.xpose.msra.mxu0 0.0
    %254 = vmatprep.subr.mxu0 0.0
    %255 = vmatpush1.xpose.msra.mxu0 0.0
    %256 = vmatprep.subr.mxu0 0.0
    %257 = vmatpush1.xpose.msra.mxu0 0.0
    %258 = vmatprep.subr.mxu0 0.0
    %259 = vmatpush1.xpose.msra.mxu0 0.0
    %260 = vmatprep.subr.mxu0 0.0
    %261 = vmatpush1.xpose.msra.mxu0 0.0
    %262 = vmatprep.subr.mxu0 0.0
    %263 = vmatpush1.xpose.msra.mxu0 0.0
    %264 = vmatprep.subr.mxu0 0.0
    %265 = vmatpush1.xpose.msra.mxu0 0.0
    %266 = vmatprep.subr.mxu0 0.0
    %267 = vmatpush1.xpose.msra.mxu0 0.0
    %268 = vmatprep.subr.mxu0 0.0
    %269 = vmatpush1.xpose.msra.mxu0 0.0
    %270 = vmatprep.subr.mxu0 0.0
    %271 = vmatpush1.xpose.msra.mxu0 0.0
    %272 = vmatprep.subr.mxu0 0.0
    %273 = vmatpush1.xpose.msra.mxu0 0.0
    %274 = vmatprep.subr.mxu0 0.0
    %275 = vmatpush1.xpose.msra.mxu0 0.0
    %276 = vmatprep.subr.mxu0 0.0
    %277 = vmatpush1.xpose.msra.mxu0 0.0
    %278 = vmatprep.subr.mxu0 0.0
    %279 = vmatpush1.xpose.msra.mxu0 0.0
    %280 = vmatprep.subr.mxu0 0.0
    %281 = vmatpush1.xpose.msra.mxu0 0.0
    %282 = vmatprep.subr.mxu0 0.0
    %283 = vmatpush1.xpose.msra.mxu0 0.0
    %284 = vmatprep.subr.mxu0 0.0
    %285 = vmatpush1.xpose.msra.mxu0 0.0
    %286 = vmatprep.subr.mxu0 0.0
    %287 = vmatpush1.xpose.msra.mxu0 0.0
    %288 = vmatprep.subr.mxu0 0.0
    %289 = vmatpush1.xpose.msra.mxu0 0.0
    %290 = vmatprep.mubr.f32.mxu0 0.0
    %v291 = vand.u32 %v67, 4294901760
    %v292 = vsub.f32 %v67, %v291
    %293 = vmatmul.mubr.f32.gmra.mrb[0].mxu0 %v292
    %v294 = vpop.f32.mrb[0].mxu0
    %v295 = vadd.f32 %v221, %v294
    %v296 = vpop.f32.mrb[0].mxu0
    %297 = vdwg.mxu0
    %298 = vmatprep.subr.mxu0 0.0
    %v299 = vand.u32 %v70, 4294901760
    %300 = vmatpush1.xpose.msra.mxu0 %v299
    %301 = vmatprep.subr.mxu0 0.0
    %302 = vmatpush1.xpose.msra.mxu0 0.0
    %303 = vmatprep.subr.mxu0 0.0
    %304 = vmatpush1.xpose.msra.mxu0 0.0
    %305 = vmatprep.subr.mxu0 0.0
    %306 = vmatpush1.xpose.msra.mxu0 0.0
    %307 = vmatprep.subr.mxu0 0.0
    %308 = vmatpush1.xpose.msra.mxu0 0.0
    %309 = vmatprep.subr.mxu0 0.0
    %310 = vmatpush1.xpose.msra.mxu0 0.0
    %311 = vmatprep.subr.mxu0 0.0
    %312 = vmatpush1.xpose.msra.mxu0 0.0
    %313 = vmatprep.subr.mxu0 0.0
    %314 = vmatpush1.xpose.msra.mxu0 0.0
    %315 = vmatprep.subr.mxu0 0.0
    %316 = vmatpush1.xpose.msra.mxu0 0.0
    %317 = vmatprep.subr.mxu0 0.0
    %318 = vmatpush1.xpose.msra.mxu0 0.0
    %319 = vmatprep.subr.mxu0 0.0
    %320 = vmatpush1.xpose.msra.mxu0 0.0
    %321 = vmatprep.subr.mxu0 0.0
    %322 = vmatpush1.xpose.msra.mxu0 0.0
    %323 = vmatprep.subr.mxu0 0.0
    %324 = vmatpush1.xpose.msra.mxu0 0.0
    %325 = vmatprep.subr.mxu0 0.0
    %326 = vmatpush1.xpose.msra.mxu0 0.0
    %327 = vmatprep.subr.mxu0 0.0
    %328 = vmatpush1.xpose.msra.mxu0 0.0
    %329 = vmatprep.subr.mxu0 0.0
    %330 = vmatpush1.xpose.msra.mxu0 0.0
    %331 = vmatprep.subr.mxu0 0.0
    %332 = vmatpush1.xpose.msra.mxu0 0.0
    %333 = vmatprep.subr.mxu0 0.0
    %334 = vmatpush1.xpose.msra.mxu0 0.0
    %335 = vmatprep.subr.mxu0 0.0
    %336 = vmatpush1.xpose.msra.mxu0 0.0
    %337 = vmatprep.subr.mxu0 0.0
    %338 = vmatpush1.xpose.msra.mxu0 0.0
    %339 = vmatprep.subr.mxu0 0.0
    %340 = vmatpush1.xpose.msra.mxu0 0.0
    %341 = vmatprep.subr.mxu0 0.0
    %342 = vmatpush1.xpose.msra.mxu0 0.0
    %343 = vmatprep.subr.mxu0 0.0
    %344 = vmatpush1.xpose.msra.mxu0 0.0
    %345 = vmatprep.subr.mxu0 0.0
    %346 = vmatpush1.xpose.msra.mxu0 0.0
    %347 = vmatprep.subr.mxu0 0.0
    %348 = vmatpush1.xpose.msra.mxu0 0.0
    %349 = vmatprep.subr.mxu0 0.0
    %350 = vmatpush1.xpose.msra.mxu0 0.0
    %351 = vmatprep.subr.mxu0 0.0
    %352 = vmatpush1.xpose.msra.mxu0 0.0
    %353 = vmatprep.subr.mxu0 0.0
    %354 = vmatpush1.xpose.msra.mxu0 0.0
    %355 = vmatprep.subr.mxu0 0.0
    %356 = vmatpush1.xpose.msra.mxu0 0.0
    %357 = vmatprep.subr.mxu0 0.0
    %358 = vmatpush1.xpose.msra.mxu0 0.0
    %359 = vmatprep.subr.mxu0 0.0
    %360 = vmatpush1.xpose.msra.mxu0 0.0
    %361 = vmatprep.subr.mxu0 0.0
    %362 = vmatpush1.xpose.msra.mxu0 0.0
    %363 = vmatprep.mubr.f32.mxu0 0.0
    %v364 = vand.u32 %v67, 4294901760
    %v365 = vsub.f32 %v67, %v364
    %v366 = vand.u32 %v365, 4294901760
    %367 = vmatmul.mubr.f32.gmra.mrb[0].mxu0 %v366
    %v368 = vpop.f32.mrb[0].mxu0
    %v369 = vadd.f32 %v295, %v368
    %v370 = vpop.f32.mrb[0].mxu0
    %371 = vdwg.mxu0
    %372 = vmatprep.subr.mxu0 0.0
    %v373 = vand.u32 %v70, 4294901760
    %v374 = vsub.f32 %v70, %v373
    %v375 = vand.u32 %v374, 4294901760
    %376 = vmatpush1.xpose.msra.mxu0 %v375
    %377 = vmatprep.subr.mxu0 0.0
    %378 = vmatpush1.xpose.msra.mxu0 0.0
    %379 = vmatprep.subr.mxu0 0.0
    %380 = vmatpush1.xpose.msra.mxu0 0.0
    %381 = vmatprep.subr.mxu0 0.0
    %382 = vmatpush1.xpose.msra.mxu0 0.0
    %383 = vmatprep.subr.mxu0 0.0
    %384 = vmatpush1.xpose.msra.mxu0 0.0
    %385 = vmatprep.subr.mxu0 0.0
    %386 = vmatpush1.xpose.msra.mxu0 0.0
    %387 = vmatprep.subr.mxu0 0.0
    %388 = vmatpush1.xpose.msra.mxu0 0.0
    %389 = vmatprep.subr.mxu0 0.0
    %390 = vmatpush1.xpose.msra.mxu0 0.0
    %391 = vmatprep.subr.mxu0 0.0
    %392 = vmatpush1.xpose.msra.mxu0 0.0
    %393 = vmatprep.subr.mxu0 0.0
    %394 = vmatpush1.xpose.msra.mxu0 0.0
    %395 = vmatprep.subr.mxu0 0.0
    %396 = vmatpush1.xpose.msra.mxu0 0.0
    %397 = vmatprep.subr.mxu0 0.0
    %398 = vmatpush1.xpose.msra.mxu0 0.0
    %399 = vmatprep.subr.mxu0 0.0
    %400 = vmatpush1.xpose.msra.mxu0 0.0
    %401 = vmatprep.subr.mxu0 0.0
    %402 = vmatpush1.xpose.msra.mxu0 0.0
    %403 = vmatprep.subr.mxu0 0.0
    %404 = vmatpush1.xpose.msra.mxu0 0.0
    %405 = vmatprep.subr.mxu0 0.0
    %406 = vmatpush1.xpose.msra.mxu0 0.0
    %407 = vmatprep.subr.mxu0 0.0
    %408 = vmatpush1.xpose.msra.mxu0 0.0
    %409 = vmatprep.subr.mxu0 0.0
    %410 = vmatpush1.xpose.msra.mxu0 0.0
    %411 = vmatprep.subr.mxu0 0.0
    %412 = vmatpush1.xpose.msra.mxu0 0.0
    %413 = vmatprep.subr.mxu0 0.0
    %414 = vmatpush1.xpose.msra.mxu0 0.0
    %415 = vmatprep.subr.mxu0 0.0
    %416 = vmatpush1.xpose.msra.mxu0 0.0
    %417 = vmatprep.subr.mxu0 0.0
    %418 = vmatpush1.xpose.msra.mxu0 0.0
    %419 = vmatprep.subr.mxu0 0.0
    %420 = vmatpush1.xpose.msra.mxu0 0.0
    %421 = vmatprep.subr.mxu0 0.0
    %422 = vmatpush1.xpose.msra.mxu0 0.0
    %423 = vmatprep.subr.mxu0 0.0
    %424 = vmatpush1.xpose.msra.mxu0 0.0
    %425 = vmatprep.subr.mxu0 0.0
    %426 = vmatpush1.xpose.msra.mxu0 0.0
    %427 = vmatprep.subr.mxu0 0.0
    %428 = vmatpush1.xpose.msra.mxu0 0.0
    %429 = vmatprep.subr.mxu0 0.0
    %430 = vmatpush1.xpose.msra.mxu0 0.0
    %431 = vmatprep.subr.mxu0 0.0
    %432 = vmatpush1.xpose.msra.mxu0 0.0
    %433 = vmatprep.subr.mxu0 0.0
    %434 = vmatpush1.xpose.msra.mxu0 0.0
    %435 = vmatprep.subr.mxu0 0.0
    %436 = vmatpush1.xpose.msra.mxu0 0.0
    %437 = vmatprep.subr.mxu0 0.0
    %438 = vmatpush1.xpose.msra.mxu0 0.0
    %439 = vmatprep.mubr.f32.mxu0 0.0
    %v440 = vand.u32 %v67, 4294901760
    %441 = vmatmul.mubr.f32.gmra.mrb[0].mxu0 %v440
    %v442 = vpop.f32.mrb[0].mxu0
    %v443 = vadd.f32 %v369, %v442
    %v444 = vpop.f32.mrb[0].mxu0
    %445 = vdwg.mxu0
    %446 = vmatprep.subr.mxu0 0.0
    %v447 = vand.u32 %v70, 4294901760
    %448 = vmatpush1.xpose.msra.mxu0 %v447
    %449 = vmatprep.subr.mxu0 0.0
    %450 = vmatpush1.xpose.msra.mxu0 0.0
    %451 = vmatprep.subr.mxu0 0.0
    %452 = vmatpush1.xpose.msra.mxu0 0.0
    %453 = vmatprep.subr.mxu0 0.0
    %454 = vmatpush1.xpose.msra.mxu0 0.0
    %455 = vmatprep.subr.mxu0 0.0
    %456 = vmatpush1.xpose.msra.mxu0 0.0
    %457 = vmatprep.subr.mxu0 0.0
    %458 = vmatpush1.xpose.msra.mxu0 0.0
    %459 = vmatprep.subr.mxu0 0.0
    %460 = vmatpush1.xpose.msra.mxu0 0.0
    %461 = vmatprep.subr.mxu0 0.0
    %462 = vmatpush1.xpose.msra.mxu0 0.0
    %463 = vmatprep.subr.mxu0 0.0
    %464 = vmatpush1.xpose.msra.mxu0 0.0
    %465 = vmatprep.subr.mxu0 0.0
    %466 = vmatpush1.xpose.msra.mxu0 0.0
    %467 = vmatprep.subr.mxu0 0.0
    %468 = vmatpush1.xpose.msra.mxu0 0.0
    %469 = vmatprep.subr.mxu0 0.0
    %470 = vmatpush1.xpose.msra.mxu0 0.0
    %471 = vmatprep.subr.mxu0 0.0
    %472 = vmatpush1.xpose.msra.mxu0 0.0
    %473 = vmatprep.subr.mxu0 0.0
    %474 = vmatpush1.xpose.msra.mxu0 0.0
    %475 = vmatprep.subr.mxu0 0.0
    %476 = vmatpush1.xpose.msra.mxu0 0.0
    %477 = vmatprep.subr.mxu0 0.0
    %478 = vmatpush1.xpose.msra.mxu0 0.0
    %479 = vmatprep.subr.mxu0 0.0
    %480 = vmatpush1.xpose.msra.mxu0 0.0
    %481 = vmatprep.subr.mxu0 0.0
    %482 = vmatpush1.xpose.msra.mxu0 0.0
    %483 = vmatprep.subr.mxu0 0.0
    %484 = vmatpush1.xpose.msra.mxu0 0.0
    %485 = vmatprep.subr.mxu0 0.0
    %486 = vmatpush1.xpose.msra.mxu0 0.0
    %487 = vmatprep.subr.mxu0 0.0
    %488 = vmatpush1.xpose.msra.mxu0 0.0
    %489 = vmatprep.subr.mxu0 0.0
    %490 = vmatpush1.xpose.msra.mxu0 0.0
    %491 = vmatprep.subr.mxu0 0.0
    %492 = vmatpush1.xpose.msra.mxu0 0.0
    %493 = vmatprep.subr.mxu0 0.0
    %494 = vmatpush1.xpose.msra.mxu0 0.0
    %495 = vmatprep.subr.mxu0 0.0
    %496 = vmatpush1.xpose.msra.mxu0 0.0
    %497 = vmatprep.subr.mxu0 0.0
    %498 = vmatpush1.xpose.msra.mxu0 0.0
    %499 = vmatprep.subr.mxu0 0.0
    %500 = vmatpush1.xpose.msra.mxu0 0.0
    %501 = vmatprep.subr.mxu0 0.0
    %502 = vmatpush1.xpose.msra.mxu0 0.0
    %503 = vmatprep.subr.mxu0 0.0
    %504 = vmatpush1.xpose.msra.mxu0 0.0
    %505 = vmatprep.subr.mxu0 0.0
    %506 = vmatpush1.xpose.msra.mxu0 0.0
    %507 = vmatprep.subr.mxu0 0.0
    %508 = vmatpush1.xpose.msra.mxu0 0.0
    %509 = vmatprep.subr.mxu0 0.0
    %510 = vmatpush1.xpose.msra.mxu0 0.0
    %511 = vmatprep.mubr.f32.mxu0 0.0
    %v512 = vand.u32 %v67, 4294901760
    %513 = vmatmul.mubr.f32.gmra.mrb[0].mxu0 %v512
    %v514 = vpop.f32.mrb[0].mxu0
    %v515 = vadd.f32 %v443, %v514
    %v516 = vpop.f32.mrb[0].mxu0
    %517 = vdwg.mxu0
    %vm518 = vcmask 64512
    %v520 = vsel %vm518, %v61, 0
    %v523 = vsel %vm518, %v62, 0
    %525 = vmatprep.subr.mxu0 0.0
    %v526 = vand.u32 %v523, 4294901760
    %527 = vmatpush1.xpose.msra.mxu0 %v526
    %528 = vmatprep.subr.mxu0 0.0
    %529 = vmatpush1.xpose.msra.mxu0 0.0
    %530 = vmatprep.subr.mxu0 0.0
    %531 = vmatpush1.xpose.msra.mxu0 0.0
    %532 = vmatprep.subr.mxu0 0.0
    %533 = vmatpush1.xpose.msra.mxu0 0.0
    %534 = vmatprep.subr.mxu0 0.0
    %535 = vmatpush1.xpose.msra.mxu0 0.0
    %536 = vmatprep.subr.mxu0 0.0
    %537 = vmatpush1.xpose.msra.mxu0 0.0
    %538 = vmatprep.subr.mxu0 0.0
    %539 = vmatpush1.xpose.msra.mxu0 0.0
    %540 = vmatprep.subr.mxu0 0.0
    %541 = vmatpush1.xpose.msra.mxu0 0.0
    %542 = vmatprep.subr.mxu0 0.0
    %543 = vmatpush1.xpose.msra.mxu0 0.0
    %544 = vmatprep.subr.mxu0 0.0
    %545 = vmatpush1.xpose.msra.mxu0 0.0
    %546 = vmatprep.subr.mxu0 0.0
    %547 = vmatpush1.xpose.msra.mxu0 0.0
    %548 = vmatprep.subr.mxu0 0.0
    %549 = vmatpush1.xpose.msra.mxu0 0.0
    %550 = vmatprep.subr.mxu0 0.0
    %551 = vmatpush1.xpose.msra.mxu0 0.0
    %552 = vmatprep.subr.mxu0 0.0
    %553 = vmatpush1.xpose.msra.mxu0 0.0
    %554 = vmatprep.subr.mxu0 0.0
    %555 = vmatpush1.xpose.msra.mxu0 0.0
    %556 = vmatprep.subr.mxu0 0.0
    %557 = vmatpush1.xpose.msra.mxu0 0.0
    %558 = vmatprep.subr.mxu0 0.0
    %559 = vmatpush1.xpose.msra.mxu0 0.0
    %560 = vmatprep.subr.mxu0 0.0
    %561 = vmatpush1.xpose.msra.mxu0 0.0
    %562 = vmatprep.subr.mxu0 0.0
    %563 = vmatpush1.xpose.msra.mxu0 0.0
    %564 = vmatprep.subr.mxu0 0.0
    %565 = vmatpush1.xpose.msra.mxu0 0.0
    %566 = vmatprep.subr.mxu0 0.0
    %567 = vmatpush1.xpose.msra.mxu0 0.0
    %568 = vmatprep.subr.mxu0 0.0
    %569 = vmatpush1.xpose.msra.mxu0 0.0
    %570 = vmatprep.subr.mxu0 0.0
    %571 = vmatpush1.xpose.msra.mxu0 0.0
    %572 = vmatprep.subr.mxu0 0.0
    %573 = vmatpush1.xpose.msra.mxu0 0.0
    %574 = vmatprep.subr.mxu0 0.0
    %575 = vmatpush1.xpose.msra.mxu0 0.0
    %576 = vmatprep.subr.mxu0 0.0
    %577 = vmatpush1.xpose.msra.mxu0 0.0
    %578 = vmatprep.subr.mxu0 0.0
    %579 = vmatpush1.xpose.msra.mxu0 0.0
    %580 = vmatprep.subr.mxu0 0.0
    %581 = vmatpush1.xpose.msra.mxu0 0.0
    %582 = vmatprep.subr.mxu0 0.0
    %583 = vmatpush1.xpose.msra.mxu0 0.0
    %584 = vmatprep.subr.mxu0 0.0
    %585 = vmatpush1.xpose.msra.mxu0 0.0
    %586 = vmatprep.subr.mxu0 0.0
    %587 = vmatpush1.xpose.msra.mxu0 0.0
    %588 = vmatprep.subr.mxu0 0.0
    %589 = vmatpush1.xpose.msra.mxu0 0.0
    %590 = vmatprep.mubr.f32.mxu0 0.0
    %v591 = vand.u32 %v520, 4294901760
    %v592 = vsub.f32 %v520, %v591
    %v593 = vand.u32 %v592, 4294901760
    %v594 = vsub.f32 %v592, %v593
    %v595 = vand.u32 %v594, 4294901760
    %596 = vmatmul.mubr.f32.gmra.mrb[0].mxu0 %v595
    %v597 = vpop.f32.mrb[0].mxu0
    %v598 = vadd.f32 %v515, %v597
    %v599 = vpop.f32.mrb[0].mxu0
    %600 = vdwg.mxu0
    %601 = vmatprep.subr.mxu0 0.0
    %v602 = vand.u32 %v523, 4294901760
    %v603 = vsub.f32 %v523, %v602
    %v604 = vand.u32 %v603, 4294901760
    %v605 = vsub.f32 %v603, %v604
    %v606 = vand.u32 %v605, 4294901760
    %607 = vmatpush1.xpose.msra.mxu0 %v606
    %608 = vmatprep.subr.mxu0 0.0
    %609 = vmatpush1.xpose.msra.mxu0 0.0
    %610 = vmatprep.subr.mxu0 0.0
    %611 = vmatpush1.xpose.msra.mxu0 0.0
    %612 = vmatprep.subr.mxu0 0.0
    %613 = vmatpush1.xpose.msra.mxu0 0.0
    %614 = vmatprep.subr.mxu0 0.0
    %615 = vmatpush1.xpose.msra.mxu0 0.0
    %616 = vmatprep.subr.mxu0 0.0
    %617 = vmatpush1.xpose.msra.mxu0 0.0
    %618 = vmatprep.subr.mxu0 0.0
    %619 = vmatpush1.xpose.msra.mxu0 0.0
    %620 = vmatprep.subr.mxu0 0.0
    %621 = vmatpush1.xpose.msra.mxu0 0.0
    %622 = vmatprep.subr.mxu0 0.0
    %623 = vmatpush1.xpose.msra.mxu0 0.0
    %624 = vmatprep.subr.mxu0 0.0
    %625 = vmatpush1.xpose.msra.mxu0 0.0
    %626 = vmatprep.subr.mxu0 0.0
    %627 = vmatpush1.xpose.msra.mxu0 0.0
    %628 = vmatprep.subr.mxu0 0.0
    %629 = vmatpush1.xpose.msra.mxu0 0.0
    %630 = vmatprep.subr.mxu0 0.0
    %631 = vmatpush1.xpose.msra.mxu0 0.0
    %632 = vmatprep.subr.mxu0 0.0
    %633 = vmatpush1.xpose.msra.mxu0 0.0
    %634 = vmatprep.subr.mxu0 0.0
    %635 = vmatpush1.xpose.msra.mxu0 0.0
    %636 = vmatprep.subr.mxu0 0.0
    %637 = vmatpush1.xpose.msra.mxu0 0.0
    %638 = vmatprep.subr.mxu0 0.0
    %639 = vmatpush1.xpose.msra.mxu0 0.0
    %640 = vmatprep.subr.mxu0 0.0
    %641 = vmatpush1.xpose.msra.mxu0 0.0
    %642 = vmatprep.subr.mxu0 0.0
    %643 = vmatpush1.xpose.msra.mxu0 0.0
    %644 = vmatprep.subr.mxu0 0.0
    %645 = vmatpush1.xpose.msra.mxu0 0.0
    %646 = vmatprep.subr.mxu0 0.0
    %647 = vmatpush1.xpose.msra.mxu0 0.0
    %648 = vmatprep.subr.mxu0 0.0
    %649 = vmatpush1.xpose.msra.mxu0 0.0
    %650 = vmatprep.subr.mxu0 0.0
    %651 = vmatpush1.xpose.msra.mxu0 0.0
    %652 = vmatprep.subr.mxu0 0.0
    %653 = vmatpush1.xpose.msra.mxu0 0.0
    %654 = vmatprep.subr.mxu0 0.0
    %655 = vmatpush1.xpose.msra.mxu0 0.0
    %656 = vmatprep.subr.mxu0 0.0
    %657 = vmatpush1.xpose.msra.mxu0 0.0
    %658 = vmatprep.subr.mxu0 0.0
    %659 = vmatpush1.xpose.msra.mxu0 0.0
    %660 = vmatprep.subr.mxu0 0.0
    %661 = vmatpush1.xpose.msra.mxu0 0.0
    %662 = vmatprep.subr.mxu0 0.0
    %663 = vmatpush1.xpose.msra.mxu0 0.0
    %664 = vmatprep.subr.mxu0 0.0
    %665 = vmatpush1.xpose.msra.mxu0 0.0
    %666 = vmatprep.subr.mxu0 0.0
    %667 = vmatpush1.xpose.msra.mxu0 0.0
    %668 = vmatprep.subr.mxu0 0.0
    %669 = vmatpush1.xpose.msra.mxu0 0.0
    %670 = vmatprep.mubr.f32.mxu0 0.0
    %v671 = vand.u32 %v520, 4294901760
    %672 = vmatmul.mubr.f32.gmra.mrb[0].mxu0 %v671
    %v673 = vpop.f32.mrb[0].mxu0
    %v674 = vadd.f32 %v598, %v673
    %v675 = vpop.f32.mrb[0].mxu0
    %676 = vdwg.mxu0
    %677 = vmatprep.subr.mxu0 0.0
    %v678 = vand.u32 %v523, 4294901760
    %v679 = vsub.f32 %v523, %v678
    %680 = vmatpush1.xpose.msra.mxu0 %v679
    %681 = vmatprep.subr.mxu0 0.0
    %682 = vmatpush1.xpose.msra.mxu0 0.0
    %683 = vmatprep.subr.mxu0 0.0
    %684 = vmatpush1.xpose.msra.mxu0 0.0
    %685 = vmatprep.subr.mxu0 0.0
    %686 = vmatpush1.xpose.msra.mxu0 0.0
    %687 = vmatprep.subr.mxu0 0.0
    %688 = vmatpush1.xpose.msra.mxu0 0.0
    %689 = vmatprep.subr.mxu0 0.0
    %690 = vmatpush1.xpose.msra.mxu0 0.0
    %691 = vmatprep.subr.mxu0 0.0
    %692 = vmatpush1.xpose.msra.mxu0 0.0
    %693 = vmatprep.subr.mxu0 0.0
    %694 = vmatpush1.xpose.msra.mxu0 0.0
    %695 = vmatprep.subr.mxu0 0.0
    %696 = vmatpush1.xpose.msra.mxu0 0.0
    %697 = vmatprep.subr.mxu0 0.0
    %698 = vmatpush1.xpose.msra.mxu0 0.0
    %699 = vmatprep.subr.mxu0 0.0
    %700 = vmatpush1.xpose.msra.mxu0 0.0
    %701 = vmatprep.subr.mxu0 0.0
    %702 = vmatpush1.xpose.msra.mxu0 0.0
    %703 = vmatprep.subr.mxu0 0.0
    %704 = vmatpush1.xpose.msra.mxu0 0.0
    %705 = vmatprep.subr.mxu0 0.0
    %706 = vmatpush1.xpose.msra.mxu0 0.0
    %707 = vmatprep.subr.mxu0 0.0
    %708 = vmatpush1.xpose.msra.mxu0 0.0
    %709 = vmatprep.subr.mxu0 0.0
    %710 = vmatpush1.xpose.msra.mxu0 0.0
    %711 = vmatprep.subr.mxu0 0.0
    %712 = vmatpush1.xpose.msra.mxu0 0.0
    %713 = vmatprep.subr.mxu0 0.0
    %714 = vmatpush1.xpose.msra.mxu0 0.0
    %715 = vmatprep.subr.mxu0 0.0
    %716 = vmatpush1.xpose.msra.mxu0 0.0
    %717 = vmatprep.subr.mxu0 0.0
    %718 = vmatpush1.xpose.msra.mxu0 0.0
    %719 = vmatprep.subr.mxu0 0.0
    %720 = vmatpush1.xpose.msra.mxu0 0.0
    %721 = vmatprep.subr.mxu0 0.0
    %722 = vmatpush1.xpose.msra.mxu0 0.0
    %723 = vmatprep.subr.mxu0 0.0
    %724 = vmatpush1.xpose.msra.mxu0 0.0
    %725 = vmatprep.subr.mxu0 0.0
    %726 = vmatpush1.xpose.msra.mxu0 0.0
    %727 = vmatprep.subr.mxu0 0.0
    %728 = vmatpush1.xpose.msra.mxu0 0.0
    %729 = vmatprep.subr.mxu0 0.0
    %730 = vmatpush1.xpose.msra.mxu0 0.0
    %731 = vmatprep.subr.mxu0 0.0
    %732 = vmatpush1.xpose.msra.mxu0 0.0
    %733 = vmatprep.subr.mxu0 0.0
    %734 = vmatpush1.xpose.msra.mxu0 0.0
    %735 = vmatprep.subr.mxu0 0.0
    %736 = vmatpush1.xpose.msra.mxu0 0.0
    %737 = vmatprep.subr.mxu0 0.0
    %738 = vmatpush1.xpose.msra.mxu0 0.0
    %739 = vmatprep.subr.mxu0 0.0
    %740 = vmatpush1.xpose.msra.mxu0 0.0
    %741 = vmatprep.subr.mxu0 0.0
    %742 = vmatpush1.xpose.msra.mxu0 0.0
    %743 = vmatprep.mubr.f32.mxu0 0.0
    %v744 = vand.u32 %v520, 4294901760
    %v745 = vsub.f32 %v520, %v744
    %746 = vmatmul.mubr.f32.gmra.mrb[0].mxu0 %v745
    %v747 = vpop.f32.mrb[0].mxu0
    %v748 = vadd.f32 %v674, %v747
    %v749 = vpop.f32.mrb[0].mxu0
    %750 = vdwg.mxu0
    %751 = vmatprep.subr.mxu0 0.0
    %v752 = vand.u32 %v523, 4294901760
    %753 = vmatpush1.xpose.msra.mxu0 %v752
    %754 = vmatprep.subr.mxu0 0.0
    %755 = vmatpush1.xpose.msra.mxu0 0.0
    %756 = vmatprep.subr.mxu0 0.0
    %757 = vmatpush1.xpose.msra.mxu0 0.0
    %758 = vmatprep.subr.mxu0 0.0
    %759 = vmatpush1.xpose.msra.mxu0 0.0
    %760 = vmatprep.subr.mxu0 0.0
    %761 = vmatpush1.xpose.msra.mxu0 0.0
    %762 = vmatprep.subr.mxu0 0.0
    %763 = vmatpush1.xpose.msra.mxu0 0.0
    %764 = vmatprep.subr.mxu0 0.0
    %765 = vmatpush1.xpose.msra.mxu0 0.0
    %766 = vmatprep.subr.mxu0 0.0
    %767 = vmatpush1.xpose.msra.mxu0 0.0
    %768 = vmatprep.subr.mxu0 0.0
    %769 = vmatpush1.xpose.msra.mxu0 0.0
    %770 = vmatprep.subr.mxu0 0.0
    %771 = vmatpush1.xpose.msra.mxu0 0.0
    %772 = vmatprep.subr.mxu0 0.0
    %773 = vmatpush1.xpose.msra.mxu0 0.0
    %774 = vmatprep.subr.mxu0 0.0
    %775 = vmatpush1.xpose.msra.mxu0 0.0
    %776 = vmatprep.subr.mxu0 0.0
    %777 = vmatpush1.xpose.msra.mxu0 0.0
    %778 = vmatprep.subr.mxu0 0.0
    %779 = vmatpush1.xpose.msra.mxu0 0.0
    %780 = vmatprep.subr.mxu0 0.0
    %781 = vmatpush1.xpose.msra.mxu0 0.0
    %782 = vmatprep.subr.mxu0 0.0
    %783 = vmatpush1.xpose.msra.mxu0 0.0
    %784 = vmatprep.subr.mxu0 0.0
    %785 = vmatpush1.xpose.msra.mxu0 0.0
    %786 = vmatprep.subr.mxu0 0.0
    %787 = vmatpush1.xpose.msra.mxu0 0.0
    %788 = vmatprep.subr.mxu0 0.0
    %789 = vmatpush1.xpose.msra.mxu0 0.0
    %790 = vmatprep.subr.mxu0 0.0
    %791 = vmatpush1.xpose.msra.mxu0 0.0
    %792 = vmatprep.subr.mxu0 0.0
    %793 = vmatpush1.xpose.msra.mxu0 0.0
    %794 = vmatprep.subr.mxu0 0.0
    %795 = vmatpush1.xpose.msra.mxu0 0.0
    %796 = vmatprep.subr.mxu0 0.0
    %797 = vmatpush1.xpose.msra.mxu0 0.0
    %798 = vmatprep.subr.mxu0 0.0
    %799 = vmatpush1.xpose.msra.mxu0 0.0
    %800 = vmatprep.subr.mxu0 0.0
    %801 = vmatpush1.xpose.msra.mxu0 0.0
    %802 = vmatprep.subr.mxu0 0.0
    %803 = vmatpush1.xpose.msra.mxu0 0.0
    %804 = vmatprep.subr.mxu0 0.0
    %805 = vmatpush1.xpose.msra.mxu0 0.0
    %806 = vmatprep.subr.mxu0 0.0
    %807 = vmatpush1.xpose.msra.mxu0 0.0
    %808 = vmatprep.subr.mxu0 0.0
    %809 = vmatpush1.xpose.msra.mxu0 0.0
    %810 = vmatprep.subr.mxu0 0.0
    %811 = vmatpush1.xpose.msra.mxu0 0.0
    %812 = vmatprep.subr.mxu0 0.0
    %813 = vmatpush1.xpose.msra.mxu0 0.0
    %814 = vmatprep.subr.mxu0 0.0
    %815 = vmatpush1.xpose.msra.mxu0 0.0
    %816 = vmatprep.mubr.f32.mxu0 0.0
    %v817 = vand.u32 %v520, 4294901760
    %v818 = vsub.f32 %v520, %v817
    %v819 = vand.u32 %v818, 4294901760
    %820 = vmatmul.mubr.f32.gmra.mrb[0].mxu0 %v819
    %v821 = vpop.f32.mrb[0].mxu0
    %v822 = vadd.f32 %v748, %v821
    %v823 = vpop.f32.mrb[0].mxu0
    %824 = vdwg.mxu0
    %825 = vmatprep.subr.mxu0 0.0
    %v826 = vand.u32 %v523, 4294901760
    %v827 = vsub.f32 %v523, %v826
    %v828 = vand.u32 %v827, 4294901760
    %829 = vmatpush1.xpose.msra.mxu0 %v828
    %830 = vmatprep.subr.mxu0 0.0
    %831 = vmatpush1.xpose.msra.mxu0 0.0
    %832 = vmatprep.subr.mxu0 0.0
    %833 = vmatpush1.xpose.msra.mxu0 0.0
    %834 = vmatprep.subr.mxu0 0.0
    %835 = vmatpush1.xpose.msra.mxu0 0.0
    %836 = vmatprep.subr.mxu0 0.0
    %837 = vmatpush1.xpose.msra.mxu0 0.0
    %838 = vmatprep.subr.mxu0 0.0
    %839 = vmatpush1.xpose.msra.mxu0 0.0
    %840 = vmatprep.subr.mxu0 0.0
    %841 = vmatpush1.xpose.msra.mxu0 0.0
    %842 = vmatprep.subr.mxu0 0.0
    %843 = vmatpush1.xpose.msra.mxu0 0.0
    %844 = vmatprep.subr.mxu0 0.0
    %845 = vmatpush1.xpose.msra.mxu0 0.0
    %846 = vmatprep.subr.mxu0 0.0
    %847 = vmatpush1.xpose.msra.mxu0 0.0
    %848 = vmatprep.subr.mxu0 0.0
    %849 = vmatpush1.xpose.msra.mxu0 0.0
    %850 = vmatprep.subr.mxu0 0.0
    %851 = vmatpush1.xpose.msra.mxu0 0.0
    %852 = vmatprep.subr.mxu0 0.0
    %853 = vmatpush1.xpose.msra.mxu0 0.0
    %854 = vmatprep.subr.mxu0 0.0
    %855 = vmatpush1.xpose.msra.mxu0 0.0
    %856 = vmatprep.subr.mxu0 0.0
    %857 = vmatpush1.xpose.msra.mxu0 0.0
    %858 = vmatprep.subr.mxu0 0.0
    %859 = vmatpush1.xpose.msra.mxu0 0.0
    %860 = vmatprep.subr.mxu0 0.0
    %861 = vmatpush1.xpose.msra.mxu0 0.0
    %862 = vmatprep.subr.mxu0 0.0
    %863 = vmatpush1.xpose.msra.mxu0 0.0
    %864 = vmatprep.subr.mxu0 0.0
    %865 = vmatpush1.xpose.msra.mxu0 0.0
    %866 = vmatprep.subr.mxu0 0.0
    %867 = vmatpush1.xpose.msra.mxu0 0.0
    %868 = vmatprep.subr.mxu0 0.0
    %869 = vmatpush1.xpose.msra.mxu0 0.0
    %870 = vmatprep.subr.mxu0 0.0
    %871 = vmatpush1.xpose.msra.mxu0 0.0
    %872 = vmatprep.subr.mxu0 0.0
    %873 = vmatpush1.xpose.msra.mxu0 0.0
    %874 = vmatprep.subr.mxu0 0.0
    %875 = vmatpush1.xpose.msra.mxu0 0.0
    %876 = vmatprep.subr.mxu0 0.0
    %877 = vmatpush1.xpose.msra.mxu0 0.0
    %878 = vmatprep.subr.mxu0 0.0
    %879 = vmatpush1.xpose.msra.mxu0 0.0
    %880 = vmatprep.subr.mxu0 0.0
    %881 = vmatpush1.xpose.msra.mxu0 0.0
    %882 = vmatprep.subr.mxu0 0.0
    %883 = vmatpush1.xpose.msra.mxu0 0.0
    %884 = vmatprep.subr.mxu0 0.0
    %885 = vmatpush1.xpose.msra.mxu0 0.0
    %886 = vmatprep.subr.mxu0 0.0
    %887 = vmatpush1.xpose.msra.mxu0 0.0
    %888 = vmatprep.subr.mxu0 0.0
    %889 = vmatpush1.xpose.msra.mxu0 0.0
    %890 = vmatprep.subr.mxu0 0.0
    %891 = vmatpush1.xpose.msra.mxu0 0.0
    %892 = vmatprep.mubr.f32.mxu0 0.0
    %v893 = vand.u32 %v520, 4294901760
    %894 = vmatmul.mubr.f32.gmra.mrb[0].mxu0 %v893
    %v895 = vpop.f32.mrb[0].mxu0
    %v896 = vadd.f32 %v822, %v895
    %v897 = vpop.f32.mrb[0].mxu0
    %898 = vdwg.mxu0
    %899 = vmatprep.subr.mxu0 0.0
    %v900 = vand.u32 %v523, 4294901760
    %901 = vmatpush1.xpose.msra.mxu0 %v900
    %902 = vmatprep.subr.mxu0 0.0
    %903 = vmatpush1.xpose.msra.mxu0 0.0
    %904 = vmatprep.subr.mxu0 0.0
    %905 = vmatpush1.xpose.msra.mxu0 0.0
    %906 = vmatprep.subr.mxu0 0.0
    %907 = vmatpush1.xpose.msra.mxu0 0.0
    %908 = vmatprep.subr.mxu0 0.0
    %909 = vmatpush1.xpose.msra.mxu0 0.0
    %910 = vmatprep.subr.mxu0 0.0
    %911 = vmatpush1.xpose.msra.mxu0 0.0
    %912 = vmatprep.subr.mxu0 0.0
    %913 = vmatpush1.xpose.msra.mxu0 0.0
    %914 = vmatprep.subr.mxu0 0.0
    %915 = vmatpush1.xpose.msra.mxu0 0.0
    %916 = vmatprep.subr.mxu0 0.0
    %917 = vmatpush1.xpose.msra.mxu0 0.0
    %918 = vmatprep.subr.mxu0 0.0
    %919 = vmatpush1.xpose.msra.mxu0 0.0
    %920 = vmatprep.subr.mxu0 0.0
    %921 = vmatpush1.xpose.msra.mxu0 0.0
    %922 = vmatprep.subr.mxu0 0.0
    %923 = vmatpush1.xpose.msra.mxu0 0.0
    %924 = vmatprep.subr.mxu0 0.0
    %925 = vmatpush1.xpose.msra.mxu0 0.0
    %926 = vmatprep.subr.mxu0 0.0
    %927 = vmatpush1.xpose.msra.mxu0 0.0
    %928 = vmatprep.subr.mxu0 0.0
    %929 = vmatpush1.xpose.msra.mxu0 0.0
    %930 = vmatprep.subr.mxu0 0.0
    %931 = vmatpush1.xpose.msra.mxu0 0.0
    %932 = vmatprep.subr.mxu0 0.0
    %933 = vmatpush1.xpose.msra.mxu0 0.0
    %934 = vmatprep.subr.mxu0 0.0
    %935 = vmatpush1.xpose.msra.mxu0 0.0
    %936 = vmatprep.subr.mxu0 0.0
    %937 = vmatpush1.xpose.msra.mxu0 0.0
    %938 = vmatprep.subr.mxu0 0.0
    %939 = vmatpush1.xpose.msra.mxu0 0.0
    %940 = vmatprep.subr.mxu0 0.0
    %941 = vmatpush1.xpose.msra.mxu0 0.0
    %942 = vmatprep.subr.mxu0 0.0
    %943 = vmatpush1.xpose.msra.mxu0 0.0
    %944 = vmatprep.subr.mxu0 0.0
    %945 = vmatpush1.xpose.msra.mxu0 0.0
    %946 = vmatprep.subr.mxu0 0.0
    %947 = vmatpush1.xpose.msra.mxu0 0.0
    %948 = vmatprep.subr.mxu0 0.0
    %949 = vmatpush1.xpose.msra.mxu0 0.0
    %950 = vmatprep.subr.mxu0 0.0
    %951 = vmatpush1.xpose.msra.mxu0 0.0
    %952 = vmatprep.subr.mxu0 0.0
    %953 = vmatpush1.xpose.msra.mxu0 0.0
    %954 = vmatprep.subr.mxu0 0.0
    %955 = vmatpush1.xpose.msra.mxu0 0.0
    %956 = vmatprep.subr.mxu0 0.0
    %957 = vmatpush1.xpose.msra.mxu0 0.0
    %958 = vmatprep.subr.mxu0 0.0
    %959 = vmatpush1.xpose.msra.mxu0 0.0
    %960 = vmatprep.subr.mxu0 0.0
    %961 = vmatpush1.xpose.msra.mxu0 0.0
    %962 = vmatprep.subr.mxu0 0.0
    %963 = vmatpush1.xpose.msra.mxu0 0.0
    %964 = vmatprep.mubr.f32.mxu0 0.0
    %v965 = vand.u32 %v520, 4294901760
    %966 = vmatmul.mubr.f32.gmra.mrb[0].mxu0 %v965
    %v967 = vpop.f32.mrb[0].mxu0
    %v968 = vadd.f32 %v896, %v967
    %v969 = vpop.f32.mrb[0].mxu0
    %970 = vdwg.mxu0
    %v971 = vld [vmem:[%s5] sm:$0xff]
    %v972 = vld [vmem:[#allocation6] sm:$0x3]
    %vm973 = vcmask 130048
    %v975 = vsel %vm973, %v971, 0
    %v978 = vsel %vm973, %v972, 0
    %980 = vmatprep.subr.mxu0 0.0
    %v981 = vand.u32 %v978, 4294901760
    %982 = vmatpush1.xpose.msra.mxu0 %v981
    %983 = vmatprep.subr.mxu0 0.0
    %984 = vmatpush1.xpose.msra.mxu0 0.0
    %985 = vmatprep.subr.mxu0 0.0
    %986 = vmatpush1.xpose.msra.mxu0 0.0
    %987 = vmatprep.subr.mxu0 0.0
    %988 = vmatpush1.xpose.msra.mxu0 0.0
    %989 = vmatprep.subr.mxu0 0.0
    %990 = vmatpush1.xpose.msra.mxu0 0.0
    %991 = vmatprep.subr.mxu0 0.0
    %992 = vmatpush1.xpose.msra.mxu0 0.0
    %993 = vmatprep.subr.mxu0 0.0
    %994 = vmatpush1.xpose.msra.mxu0 0.0
    %995 = vmatprep.subr.mxu0 0.0
    %996 = vmatpush1.xpose.msra.mxu0 0.0
    %997 = vmatprep.subr.mxu0 0.0
    %998 = vmatpush1.xpose.msra.mxu0 0.0
    %999 = vmatprep.subr.mxu0 0.0
    %1000 = vmatpush1.xpose.msra.mxu0 0.0
    %1001 = vmatprep.subr.mxu0 0.0
    %1002 = vmatpush1.xpose.msra.mxu0 0.0
    %1003 = vmatprep.subr.mxu0 0.0
    %1004 = vmatpush1.xpose.msra.mxu0 0.0
    %1005 = vmatprep.subr.mxu0 0.0
    %1006 = vmatpush1.xpose.msra.mxu0 0.0
    %1007 = vmatprep.subr.mxu0 0.0
    %1008 = vmatpush1.xpose.msra.mxu0 0.0
    %1009 = vmatprep.subr.mxu0 0.0
    %1010 = vmatpush1.xpose.msra.mxu0 0.0
    %1011 = vmatprep.subr.mxu0 0.0
    %1012 = vmatpush1.xpose.msra.mxu0 0.0
    %1013 = vmatprep.subr.mxu0 0.0
    %1014 = vmatpush1.xpose.msra.mxu0 0.0
    %1015 = vmatprep.subr.mxu0 0.0
    %1016 = vmatpush1.xpose.msra.mxu0 0.0
    %1017 = vmatprep.subr.mxu0 0.0
    %1018 = vmatpush1.xpose.msra.mxu0 0.0
    %1019 = vmatprep.subr.mxu0 0.0
    %1020 = vmatpush1.xpose.msra.mxu0 0.0
    %1021 = vmatprep.subr.mxu0 0.0
    %1022 = vmatpush1.xpose.msra.mxu0 0.0
    %1023 = vmatprep.subr.mxu0 0.0
    %1024 = vmatpush1.xpose.msra.mxu0 0.0
    %1025 = vmatprep.subr.mxu0 0.0
    %1026 = vmatpush1.xpose.msra.mxu0 0.0
    %1027 = vmatprep.subr.mxu0 0.0
    %1028 = vmatpush1.xpose.msra.mxu0 0.0
    %1029 = vmatprep.subr.mxu0 0.0
    %1030 = vmatpush1.xpose.msra.mxu0 0.0
    %1031 = vmatprep.subr.mxu0 0.0
    %1032 = vmatpush1.xpose.msra.mxu0 0.0
    %1033 = vmatprep.subr.mxu0 0.0
    %1034 = vmatpush1.xpose.msra.mxu0 0.0
    %1035 = vmatprep.subr.mxu0 0.0
    %1036 = vmatpush1.xpose.msra.mxu0 0.0
    %1037 = vmatprep.subr.mxu0 0.0
    %1038 = vmatpush1.xpose.msra.mxu0 0.0
    %1039 = vmatprep.subr.mxu0 0.0
    %1040 = vmatpush1.xpose.msra.mxu0 0.0
    %1041 = vmatprep.subr.mxu0 0.0
    %1042 = vmatpush1.xpose.msra.mxu0 0.0
    %1043 = vmatprep.subr.mxu0 0.0
    %1044 = vmatpush1.xpose.msra.mxu0 0.0
    %1045 = vmatprep.mubr.f32.mxu0 0.0
    %v1046 = vand.u32 %v975, 4294901760
    %v1047 = vsub.f32 %v975, %v1046
    %v1048 = vand.u32 %v1047, 4294901760
    %v1049 = vsub.f32 %v1047, %v1048
    %v1050 = vand.u32 %v1049, 4294901760
    %1051 = vmatmul.mubr.f32.gmra.mrb[0].mxu0 %v1050
    %v1052 = vpop.f32.mrb[0].mxu0
    %v1053 = vadd.f32 0.0, %v1052
    %v1054 = vpop.f32.mrb[0].mxu0
    %1055 = vdwg.mxu0
    %1056 = vmatprep.subr.mxu0 0.0
    %v1057 = vand.u32 %v978, 4294901760
    %v1058 = vsub.f32 %v978, %v1057
    %v1059 = vand.u32 %v1058, 4294901760
    %v1060 = vsub.f32 %v1058, %v1059
    %v1061 = vand.u32 %v1060, 4294901760
    %1062 = vmatpush1.xpose.msra.mxu0 %v1061
    %1063 = vmatprep.subr.mxu0 0.0
    %1064 = vmatpush1.xpose.msra.mxu0 0.0
    %1065 = vmatprep.subr.mxu0 0.0
    %1066 = vmatpush1.xpose.msra.mxu0 0.0
    %1067 = vmatprep.subr.mxu0 0.0
    %1068 = vmatpush1.xpose.msra.mxu0 0.0
    %1069 = vmatprep.subr.mxu0 0.0
    %1070 = vmatpush1.xpose.msra.mxu0 0.0
    %1071 = vmatprep.subr.mxu0 0.0
    %1072 = vmatpush1.xpose.msra.mxu0 0.0
    %1073 = vmatprep.subr.mxu0 0.0
    %1074 = vmatpush1.xpose.msra.mxu0 0.0
    %1075 = vmatprep.subr.mxu0 0.0
    %1076 = vmatpush1.xpose.msra.mxu0 0.0
    %1077 = vmatprep.subr.mxu0 0.0
    %1078 = vmatpush1.xpose.msra.mxu0 0.0
    %1079 = vmatprep.subr.mxu0 0.0
    %1080 = vmatpush1.xpose.msra.mxu0 0.0
    %1081 = vmatprep.subr.mxu0 0.0
    %1082 = vmatpush1.xpose.msra.mxu0 0.0
    %1083 = vmatprep.subr.mxu0 0.0
    %1084 = vmatpush1.xpose.msra.mxu0 0.0
    %1085 = vmatprep.subr.mxu0 0.0
    %1086 = vmatpush1.xpose.msra.mxu0 0.0
    %1087 = vmatprep.subr.mxu0 0.0
    %1088 = vmatpush1.xpose.msra.mxu0 0.0
    %1089 = vmatprep.subr.mxu0 0.0
    %1090 = vmatpush1.xpose.msra.mxu0 0.0
    %1091 = vmatprep.subr.mxu0 0.0
    %1092 = vmatpush1.xpose.msra.mxu0 0.0
    %1093 = vmatprep.subr.mxu0 0.0
    %1094 = vmatpush1.xpose.msra.mxu0 0.0
    %1095 = vmatprep.subr.mxu0 0.0
    %1096 = vmatpush1.xpose.msra.mxu0 0.0
    %1097 = vmatprep.subr.mxu0 0.0
    %1098 = vmatpush1.xpose.msra.mxu0 0.0
    %1099 = vmatprep.subr.mxu0 0.0
    %1100 = vmatpush1.xpose.msra.mxu0 0.0
    %1101 = vmatprep.subr.mxu0 0.0
    %1102 = vmatpush1.xpose.msra.mxu0 0.0
    %1103 = vmatprep.subr.mxu0 0.0
    %1104 = vmatpush1.xpose.msra.mxu0 0.0
    %1105 = vmatprep.subr.mxu0 0.0
    %1106 = vmatpush1.xpose.msra.mxu0 0.0
    %1107 = vmatprep.subr.mxu0 0.0
    %1108 = vmatpush1.xpose.msra.mxu0 0.0
    %1109 = vmatprep.subr.mxu0 0.0
    %1110 = vmatpush1.xpose.msra.mxu0 0.0
    %1111 = vmatprep.subr.mxu0 0.0
    %1112 = vmatpush1.xpose.msra.mxu0 0.0
    %1113 = vmatprep.subr.mxu0 0.0
    %1114 = vmatpush1.xpose.msra.mxu0 0.0
    %1115 = vmatprep.subr.mxu0 0.0
    %1116 = vmatpush1.xpose.msra.mxu0 0.0
    %1117 = vmatprep.subr.mxu0 0.0
    %1118 = vmatpush1.xpose.msra.mxu0 0.0
    %1119 = vmatprep.subr.mxu0 0.0
    %1120 = vmatpush1.xpose.msra.mxu0 0.0
    %1121 = vmatprep.subr.mxu0 0.0
    %1122 = vmatpush1.xpose.msra.mxu0 0.0
    %1123 = vmatprep.subr.mxu0 0.0
    %1124 = vmatpush1.xpose.msra.mxu0 0.0
    %1125 = vmatprep.mubr.f32.mxu0 0.0
    %v1126 = vand.u32 %v975, 4294901760
    %1127 = vmatmul.mubr.f32.gmra.mrb[0].mxu0 %v1126
    %v1128 = vpop.f32.mrb[0].mxu0
    %v1129 = vadd.f32 %v1053, %v1128
    %v1130 = vpop.f32.mrb[0].mxu0
    %1131 = vdwg.mxu0
    %1132 = vmatprep.subr.mxu0 0.0
    %v1133 = vand.u32 %v978, 4294901760
    %v1134 = vsub.f32 %v978, %v1133
    %1135 = vmatpush1.xpose.msra.mxu0 %v1134
    %1136 = vmatprep.subr.mxu0 0.0
    %1137 = vmatpush1.xpose.msra.mxu0 0.0
    %1138 = vmatprep.subr.mxu0 0.0
    %1139 = vmatpush1.xpose.msra.mxu0 0.0
    %1140 = vmatprep.subr.mxu0 0.0
    %1141 = vmatpush1.xpose.msra.mxu0 0.0
    %1142 = vmatprep.subr.mxu0 0.0
    %1143 = vmatpush1.xpose.msra.mxu0 0.0
    %1144 = vmatprep.subr.mxu0 0.0
    %1145 = vmatpush1.xpose.msra.mxu0 0.0
    %1146 = vmatprep.subr.mxu0 0.0
    %1147 = vmatpush1.xpose.msra.mxu0 0.0
    %1148 = vmatprep.subr.mxu0 0.0
    %1149 = vmatpush1.xpose.msra.mxu0 0.0
    %1150 = vmatprep.subr.mxu0 0.0
    %1151 = vmatpush1.xpose.msra.mxu0 0.0
    %1152 = vmatprep.subr.mxu0 0.0
    %1153 = vmatpush1.xpose.msra.mxu0 0.0
    %1154 = vmatprep.subr.mxu0 0.0
    %1155 = vmatpush1.xpose.msra.mxu0 0.0
    %1156 = vmatprep.subr.mxu0 0.0
    %1157 = vmatpush1.xpose.msra.mxu0 0.0
    %1158 = vmatprep.subr.mxu0 0.0
    %1159 = vmatpush1.xpose.msra.mxu0 0.0
    %1160 = vmatprep.subr.mxu0 0.0
    %1161 = vmatpush1.xpose.msra.mxu0 0.0
    %1162 = vmatprep.subr.mxu0 0.0
    %1163 = vmatpush1.xpose.msra.mxu0 0.0
    %1164 = vmatprep.subr.mxu0 0.0
    %1165 = vmatpush1.xpose.msra.mxu0 0.0
    %1166 = vmatprep.subr.mxu0 0.0
    %1167 = vmatpush1.xpose.msra.mxu0 0.0
    %1168 = vmatprep.subr.mxu0 0.0
    %1169 = vmatpush1.xpose.msra.mxu0 0.0
    %1170 = vmatprep.subr.mxu0 0.0
    %1171 = vmatpush1.xpose.msra.mxu0 0.0
    %1172 = vmatprep.subr.mxu0 0.0
    %1173 = vmatpush1.xpose.msra.mxu0 0.0
    %1174 = vmatprep.subr.mxu0 0.0
    %1175 = vmatpush1.xpose.msra.mxu0 0.0
    %1176 = vmatprep.subr.mxu0 0.0
    %1177 = vmatpush1.xpose.msra.mxu0 0.0
    %1178 = vmatprep.subr.mxu0 0.0
    %1179 = vmatpush1.xpose.msra.mxu0 0.0
    %1180 = vmatprep.subr.mxu0 0.0
    %1181 = vmatpush1.xpose.msra.mxu0 0.0
    %1182 = vmatprep.subr.mxu0 0.0
    %1183 = vmatpush1.xpose.msra.mxu0 0.0
    %1184 = vmatprep.subr.mxu0 0.0
    %1185 = vmatpush1.xpose.msra.mxu0 0.0
    %1186 = vmatprep.subr.mxu0 0.0
    %1187 = vmatpush1.xpose.msra.mxu0 0.0
    %1188 = vmatprep.subr.mxu0 0.0
    %1189 = vmatpush1.xpose.msra.mxu0 0.0
    %1190 = vmatprep.subr.mxu0 0.0
    %1191 = vmatpush1.xpose.msra.mxu0 0.0
    %1192 = vmatprep.subr.mxu0 0.0
    %1193 = vmatpush1.xpose.msra.mxu0 0.0
    %1194 = vmatprep.subr.mxu0 0.0
    %1195 = vmatpush1.xpose.msra.mxu0 0.0
    %1196 = vmatprep.subr.mxu0 0.0
    %1197 = vmatpush1.xpose.msra.mxu0 0.0
    %1198 = vmatprep.mubr.f32.mxu0 0.0
    %v1199 = vand.u32 %v975, 4294901760
    %v1200 = vsub.f32 %v975, %v1199
    %1201 = vmatmul.mubr.f32.gmra.mrb[0].mxu0 %v1200
    %v1202 = vpop.f32.mrb[0].mxu0
    %v1203 = vadd.f32 %v1129, %v1202
    %v1204 = vpop.f32.mrb[0].mxu0
    %1205 = vdwg.mxu0
    %1206 = vmatprep.subr.mxu0 0.0
    %v1207 = vand.u32 %v978, 4294901760
    %1208 = vmatpush1.xpose.msra.mxu0 %v1207
    %1209 = vmatprep.subr.mxu0 0.0
    %1210 = vmatpush1.xpose.msra.mxu0 0.0
    %1211 = vmatprep.subr.mxu0 0.0
    %1212 = vmatpush1.xpose.msra.mxu0 0.0
    %1213 = vmatprep.subr.mxu0 0.0
    %1214 = vmatpush1.xpose.msra.mxu0 0.0
    %1215 = vmatprep.subr.mxu0 0.0
    %1216 = vmatpush1.xpose.msra.mxu0 0.0
    %1217 = vmatprep.subr.mxu0 0.0
    %1218 = vmatpush1.xpose.msra.mxu0 0.0
    %1219 = vmatprep.subr.mxu0 0.0
    %1220 = vmatpush1.xpose.msra.mxu0 0.0
    %1221 = vmatprep.subr.mxu0 0.0
    %1222 = vmatpush1.xpose.msra.mxu0 0.0
    %1223 = vmatprep.subr.mxu0 0.0
    %1224 = vmatpush1.xpose.msra.mxu0 0.0
    %1225 = vmatprep.subr.mxu0 0.0
    %1226 = vmatpush1.xpose.msra.mxu0 0.0
    %1227 = vmatprep.subr.mxu0 0.0
    %1228 = vmatpush1.xpose.msra.mxu0 0.0
    %1229 = vmatprep.subr.mxu0 0.0
    %1230 = vmatpush1.xpose.msra.mxu0 0.0
    %1231 = vmatprep.subr.mxu0 0.0
    %1232 = vmatpush1.xpose.msra.mxu0 0.0
    %1233 = vmatprep.subr.mxu0 0.0
    %1234 = vmatpush1.xpose.msra.mxu0 0.0
    %1235 = vmatprep.subr.mxu0 0.0
    %1236 = vmatpush1.xpose.msra.mxu0 0.0
    %1237 = vmatprep.subr.mxu0 0.0
    %1238 = vmatpush1.xpose.msra.mxu0 0.0
    %1239 = vmatprep.subr.mxu0 0.0
    %1240 = vmatpush1.xpose.msra.mxu0 0.0
    %1241 = vmatprep.subr.mxu0 0.0
    %1242 = vmatpush1.xpose.msra.mxu0 0.0
    %1243 = vmatprep.subr.mxu0 0.0
    %1244 = vmatpush1.xpose.msra.mxu0 0.0
    %1245 = vmatprep.subr.mxu0 0.0
    %1246 = vmatpush1.xpose.msra.mxu0 0.0
    %1247 = vmatprep.subr.mxu0 0.0
    %1248 = vmatpush1.xpose.msra.mxu0 0.0
    %1249 = vmatprep.subr.mxu0 0.0
    %1250 = vmatpush1.xpose.msra.mxu0 0.0
    %1251 = vmatprep.subr.mxu0 0.0
    %1252 = vmatpush1.xpose.msra.mxu0 0.0
    %1253 = vmatprep.subr.mxu0 0.0
    %1254 = vmatpush1.xpose.msra.mxu0 0.0
    %1255 = vmatprep.subr.mxu0 0.0
    %1256 = vmatpush1.xpose.msra.mxu0 0.0
    %1257 = vmatprep.subr.mxu0 0.0
    %1258 = vmatpush1.xpose.msra.mxu0 0.0
    %1259 = vmatprep.subr.mxu0 0.0
    %1260 = vmatpush1.xpose.msra.mxu0 0.0
    %1261 = vmatprep.subr.mxu0 0.0
    %1262 = vmatpush1.xpose.msra.mxu0 0.0
    %1263 = vmatprep.subr.mxu0 0.0
    %1264 = vmatpush1.xpose.msra.mxu0 0.0
    %1265 = vmatprep.subr.mxu0 0.0
    %1266 = vmatpush1.xpose.msra.mxu0 0.0
    %1267 = vmatprep.subr.mxu0 0.0
    %1268 = vmatpush1.xpose.msra.mxu0 0.0
    %1269 = vmatprep.subr.mxu0 0.0
    %1270 = vmatpush1.xpose.msra.mxu0 0.0
    %1271 = vmatprep.mubr.f32.mxu0 0.0
    %v1272 = vand.u32 %v975, 4294901760
    %v1273 = vsub.f32 %v975, %v1272
    %v1274 = vand.u32 %v1273, 4294901760
    %1275 = vmatmul.mubr.f32.gmra.mrb[0].mxu0 %v1274
    %v1276 = vpop.f32.mrb[0].mxu0
    %v1277 = vadd.f32 %v1203, %v1276
    %v1278 = vpop.f32.mrb[0].mxu0
    %1279 = vdwg.mxu0
    %1280 = vmatprep.subr.mxu0 0.0
    %v1281 = vand.u32 %v978, 4294901760
    %v1282 = vsub.f32 %v978, %v1281
    %v1283 = vand.u32 %v1282, 4294901760
    %1284 = vmatpush1.xpose.msra.mxu0 %v1283
    %1285 = vmatprep.subr.mxu0 0.0
    %1286 = vmatpush1.xpose.msra.mxu0 0.0
    %1287 = vmatprep.subr.mxu0 0.0
    %1288 = vmatpush1.xpose.msra.mxu0 0.0
    %1289 = vmatprep.subr.mxu0 0.0
    %1290 = vmatpush1.xpose.msra.mxu0 0.0
    %1291 = vmatprep.subr.mxu0 0.0
    %1292 = vmatpush1.xpose.msra.mxu0 0.0
    %1293 = vmatprep.subr.mxu0 0.0
    %1294 = vmatpush1.xpose.msra.mxu0 0.0
    %1295 = vmatprep.subr.mxu0 0.0
    %1296 = vmatpush1.xpose.msra.mxu0 0.0
    %1297 = vmatprep.subr.mxu0 0.0
    %1298 = vmatpush1.xpose.msra.mxu0 0.0
    %1299 = vmatprep.subr.mxu0 0.0
    %1300 = vmatpush1.xpose.msra.mxu0 0.0
    %1301 = vmatprep.subr.mxu0 0.0
    %1302 = vmatpush1.xpose.msra.mxu0 0.0
    %1303 = vmatprep.subr.mxu0 0.0
    %1304 = vmatpush1.xpose.msra.mxu0 0.0
    %1305 = vmatprep.subr.mxu0 0.0
    %1306 = vmatpush1.xpose.msra.mxu0 0.0
    %1307 = vmatprep.subr.mxu0 0.0
    %1308 = vmatpush1.xpose.msra.mxu0 0.0
    %1309 = vmatprep.subr.mxu0 0.0
    %1310 = vmatpush1.xpose.msra.mxu0 0.0
    %1311 = vmatprep.subr.mxu0 0.0
    %1312 = vmatpush1.xpose.msra.mxu0 0.0
    %1313 = vmatprep.subr.mxu0 0.0
    %1314 = vmatpush1.xpose.msra.mxu0 0.0
    %1315 = vmatprep.subr.mxu0 0.0
    %1316 = vmatpush1.xpose.msra.mxu0 0.0
    %1317 = vmatprep.subr.mxu0 0.0
    %1318 = vmatpush1.xpose.msra.mxu0 0.0
    %1319 = vmatprep.subr.mxu0 0.0
    %1320 = vmatpush1.xpose.msra.mxu0 0.0
    %1321 = vmatprep.subr.mxu0 0.0
    %1322 = vmatpush1.xpose.msra.mxu0 0.0
    %1323 = vmatprep.subr.mxu0 0.0
    %1324 = vmatpush1.xpose.msra.mxu0 0.0
    %1325 = vmatprep.subr.mxu0 0.0
    %1326 = vmatpush1.xpose.msra.mxu0 0.0
    %1327 = vmatprep.subr.mxu0 0.0
    %1328 = vmatpush1.xpose.msra.mxu0 0.0
    %1329 = vmatprep.subr.mxu0 0.0
    %1330 = vmatpush1.xpose.msra.mxu0 0.0
    %1331 = vmatprep.subr.mxu0 0.0
    %1332 = vmatpush1.xpose.msra.mxu0 0.0
    %1333 = vmatprep.subr.mxu0 0.0
    %1334 = vmatpush1.xpose.msra.mxu0 0.0
    %1335 = vmatprep.subr.mxu0 0.0
    %1336 = vmatpush1.xpose.msra.mxu0 0.0
    %1337 = vmatprep.subr.mxu0 0.0
    %1338 = vmatpush1.xpose.msra.mxu0 0.0
    %1339 = vmatprep.subr.mxu0 0.0
    %1340 = vmatpush1.xpose.msra.mxu0 0.0
    %1341 = vmatprep.subr.mxu0 0.0
    %1342 = vmatpush1.xpose.msra.mxu0 0.0
    %1343 = vmatprep.subr.mxu0 0.0
    %1344 = vmatpush1.xpose.msra.mxu0 0.0
    %1345 = vmatprep.subr.mxu0 0.0
    %1346 = vmatpush1.xpose.msra.mxu0 0.0
    %1347 = vmatprep.mubr.f32.mxu0 0.0
    %v1348 = vand.u32 %v975, 4294901760
    %1349 = vmatmul.mubr.f32.gmra.mrb[0].mxu0 %v1348
    %v1350 = vpop.f32.mrb[0].mxu0
    %v1351 = vadd.f32 %v1277, %v1350
    %v1352 = vpop.f32.mrb[0].mxu0
    %1353 = vdwg.mxu0
    %1354 = vmatprep.subr.mxu0 0.0
    %v1355 = vand.u32 %v978, 4294901760
    %1356 = vmatpush1.xpose.msra.mxu0 %v1355
    %1357 = vmatprep.subr.mxu0 0.0
    %1358 = vmatpush1.xpose.msra.mxu0 0.0
    %1359 = vmatprep.subr.mxu0 0.0
    %1360 = vmatpush1.xpose.msra.mxu0 0.0
    %1361 = vmatprep.subr.mxu0 0.0
    %1362 = vmatpush1.xpose.msra.mxu0 0.0
    %1363 = vmatprep.subr.mxu0 0.0
    %1364 = vmatpush1.xpose.msra.mxu0 0.0
    %1365 = vmatprep.subr.mxu0 0.0
    %1366 = vmatpush1.xpose.msra.mxu0 0.0
    %1367 = vmatprep.subr.mxu0 0.0
    %1368 = vmatpush1.xpose.msra.mxu0 0.0
    %1369 = vmatprep.subr.mxu0 0.0
    %1370 = vmatpush1.xpose.msra.mxu0 0.0
    %1371 = vmatprep.subr.mxu0 0.0
    %1372 = vmatpush1.xpose.msra.mxu0 0.0
    %1373 = vmatprep.subr.mxu0 0.0
    %1374 = vmatpush1.xpose.msra.mxu0 0.0
    %1375 = vmatprep.subr.mxu0 0.0
    %1376 = vmatpush1.xpose.msra.mxu0 0.0
    %1377 = vmatprep.subr.mxu0 0.0
    %1378 = vmatpush1.xpose.msra.mxu0 0.0
    %1379 = vmatprep.subr.mxu0 0.0
    %1380 = vmatpush1.xpose.msra.mxu0 0.0
    %1381 = vmatprep.subr.mxu0 0.0
    %1382 = vmatpush1.xpose.msra.mxu0 0.0
    %1383 = vmatprep.subr.mxu0 0.0
    %1384 = vmatpush1.xpose.msra.mxu0 0.0
    %1385 = vmatprep.subr.mxu0 0.0
    %1386 = vmatpush1.xpose.msra.mxu0 0.0
    %1387 = vmatprep.subr.mxu0 0.0
    %1388 = vmatpush1.xpose.msra.mxu0 0.0
    %1389 = vmatprep.subr.mxu0 0.0
    %1390 = vmatpush1.xpose.msra.mxu0 0.0
    %1391 = vmatprep.subr.mxu0 0.0
    %1392 = vmatpush1.xpose.msra.mxu0 0.0
    %1393 = vmatprep.subr.mxu0 0.0
    %1394 = vmatpush1.xpose.msra.mxu0 0.0
    %1395 = vmatprep.subr.mxu0 0.0
    %1396 = vmatpush1.xpose.msra.mxu0 0.0
    %1397 = vmatprep.subr.mxu0 0.0
    %1398 = vmatpush1.xpose.msra.mxu0 0.0
    %1399 = vmatprep.subr.mxu0 0.0
    %1400 = vmatpush1.xpose.msra.mxu0 0.0
    %1401 = vmatprep.subr.mxu0 0.0
    %1402 = vmatpush1.xpose.msra.mxu0 0.0
    %1403 = vmatprep.subr.mxu0 0.0
    %1404 = vmatpush1.xpose.msra.mxu0 0.0
    %1405 = vmatprep.subr.mxu0 0.0
    %1406 = vmatpush1.xpose.msra.mxu0 0.0
    %1407 = vmatprep.subr.mxu0 0.0
    %1408 = vmatpush1.xpose.msra.mxu0 0.0
    %1409 = vmatprep.subr.mxu0 0.0
    %1410 = vmatpush1.xpose.msra.mxu0 0.0
    %1411 = vmatprep.subr.mxu0 0.0
    %1412 = vmatpush1.xpose.msra.mxu0 0.0
    %1413 = vmatprep.subr.mxu0 0.0
    %1414 = vmatpush1.xpose.msra.mxu0 0.0
    %1415 = vmatprep.subr.mxu0 0.0
    %1416 = vmatpush1.xpose.msra.mxu0 0.0
    %1417 = vmatprep.subr.mxu0 0.0
    %1418 = vmatpush1.xpose.msra.mxu0 0.0
    %1419 = vmatprep.mubr.f32.mxu0 0.0
    %v1420 = vand.u32 %v975, 4294901760
    %1421 = vmatmul.mubr.f32.gmra.mrb[0].mxu0 %v1420
    %v1422 = vpop.f32.mrb[0].mxu0
    %v1423 = vadd.f32 %v1351, %v1422
    %v1424 = vpop.f32.mrb[0].mxu0
    %1425 = vdwg.mxu0
    %v1426 = vadd.f32 %v968, %v1423
    %v1427 = vld [vmem:[%s6] sm:$0xff]
    %1429 = vset.pattern.permute.xlu0 0
    %1430 = vperm.xlu0 %1429, %v1427
    %v1431 = vpop.permute.xlu0 %1430
    %v1433 = vadd.f32 %v1426, %v1431
    %vm1434 = vcmask 15360
    %1435 = vst.msk [vmem:[%s7] sm:$0xff] %vm1434, %v1433
    // Predicated region
    $region42: #{tpu_custom_call.1} parent=1 // pred_check
      _
    $region43: #{tpu_custom_call.1} parent=1 // pred_check_branch
      %1437 = sbr.rel (0) target = $region45
    $region44: #{tpu_custom_call.1} parent=1 // pred_region
      _
    $region45: #{tpu_custom_call.1} parent=1 // pred_fallthru
      _
    // Predicated region
    $region46: #{tpu_custom_call.1} parent=1 // pred_check
      _
    $region47: #{tpu_custom_call.1} parent=1 // pred_check_branch
      %1439 = sbr.rel (0) target = $region49
    $region48: #{tpu_custom_call.1} parent=1 // pred_region
      _
    $region49: #{tpu_custom_call.1} parent=1 // pred_fallthru
      _
    %1440 = vsyncpa [#allocation3], 1
    %1441 = vsyncpa [#allocation5], 1

</llo_original>
